<compile_context>
chip_gen: v5e
topology: v5e:2x2
jax: 0.10.0
libtpu: 0.0.40
codegen_flags: <defaults>
</compile_context>

<pallas_src>
import functools
import math

import jax
import jax.numpy as jnp
import numpy as np
from jax.experimental import pallas as pl
from jax.experimental.pallas import tpu as pltpu


# --------------------------------------------------------------------------------------
# VMEM budget (per generation): ~96 MiB on 128-MiB parts (v5e/v6e), ~48 MiB fallback (v7x).
# --------------------------------------------------------------------------------------
@functools.lru_cache(maxsize=1)
def _vmem_budget_bytes():
    try:
        cap = int(pltpu.get_tpu_info().vmem_capacity_bytes)
    except Exception:
        cap = 64 * 1024 * 1024            # conservative (v7x-sized) fallback
    return int(min(cap * 3 // 4, 100 * 1024 * 1024))


def _const_spec(shape, buffered):
    """Grid-constant block.  pl.Buffered(1): no double-buffering for data that never changes."""
    idx = lambda *args: (0,) * len(shape)
    if buffered:
        return pl.BlockSpec(shape, idx, pipeline_mode=pl.Buffered(1))
    return pl.BlockSpec(shape, idx)


def _with_buffered_fallback(fn, *args, **kwargs):
    """Call fn with single-buffered constant specs; retry with default double-buffering if
    this JAX/Mosaic build rejects BlockSpec(pipeline_mode=pl.Buffered(1))."""
    try:
        return fn(*args, buffered=True, **kwargs)
    except Exception:
        return fn(*args, buffered=False, **kwargs)


# --------------------------------------------------------------------------------------
# Kernel A: self-attention (q == k == v) + fused MHA output projection (fc).
# One grid step = all n_head bmm slices of a group of `gb` output batches.
# --------------------------------------------------------------------------------------
def _attn_fc_kernel(qkv_ref, mask_ref, wfc_ref, bfc_ref, y_ref, attn_ref, *, inv_norm):
    qkv4 = qkv_ref[...]                                  # (H, gb, Lq, dk) bf16, Q == K == V
    H, gb, Lq, dk = qkv4.shape
    mb = mask_ref[...] != 0                              # (gb, Lq, Lk) bool, True = masked
    Lk = mb.shape[-1]
    wfc = wfc_ref[...]                                   # (H, dk, dm) bf16
    dm = wfc.shape[-1]

    qkv = qkv4.reshape(H * gb, Lq, dk)

    # scores = q @ k^T / sqrt(d_k): batched over the H*gb bmm slices, f32 accumulation,
    # contraction over the last dims (no K transpose materialized).
    s = jax.lax.dot_general(
        qkv, qkv, dimension_numbers=(((2,), (2,)), ((0,), (0,))),
        preferred_element_type=jnp.float32) * inv_norm   # (H*gb, Lq, Lk)

    # masked_fill: every head of output batch b' uses slf_attn_mask[b'], which is exactly
    # the PyTorch repeat(n_head,1,1)/view(sz_b*n_head,...) pairing (see wrapper).
    s = s.reshape(H, gb, Lq, Lk)
    s = jnp.where(mb[None], jnp.float32(-1e9), s)

    # softmax in f32; EUP approx reciprocal for the denominator.
    s = s - jnp.max(s, axis=-1, keepdims=True)
    e = jnp.exp(s)
    p = e * pl.reciprocal(jnp.sum(e, axis=-1, keepdims=True), approx=True)  # (H, gb, Lq, Lk)

    attn_ref[...] = p.astype(attn_ref.dtype)             # bf16 writeback: half the f32 bytes

    # context = p @ v
    pv = jax.lax.dot_general(
        p.reshape(H * gb, Lq, Lk).astype(qkv.dtype), qkv,
        dimension_numbers=(((2,), (1,)), ((0,), (0,))),
        preferred_element_type=jnp.float32)               # (H*gb, Lq, dk) f32

    # Fused output projection: y[b'] = sum_h ctx[h, b'] @ Wfc[h*dk:(h+1)*dk, :] + bfc.
    # Written as one lane-dense (gb, Lq, d_model) block (no masked vst, no un-split transpose).
    pv = pv.reshape(H, gb * Lq, dk)
    y = jnp.zeros((gb * Lq, dm), jnp.float32)
    for h in range(H):                                    # static unroll over heads
        y = y + jnp.dot(pv[h].astype(jnp.bfloat16), wfc[h],
                        preferred_element_type=jnp.float32)
    y_ref[...] = (y + bfc_ref[...]).reshape(gb, Lq, dm).astype(y_ref.dtype)


def _pick_attn_group(B, H, Lq, Lk, dk, dm, attn_bytes, budget):
    """Largest divisor `gb` of B that fits the VMEM budget while keeping >= 2 grid steps."""
    def est(gb):
        b = 2 * H * gb * Lq * dk * 2            # qkv in (bf16, double-buffered)
        b += 2 * gb * Lq * Lk                   # int8 mask in
        b += H * dk * dm * 2 + 4 * dm           # fc weight + bias (single-buffered consts)
        b += 2 * gb * Lq * dm * 2               # y out (bf16)
        b += 2 * H * gb * Lq * Lk * attn_bytes  # attn out
        b += 3 * H * gb * Lq * Lk * 4           # scores / exp / probs temporaries (f32)
        b += H * gb * Lq * dk * 4 + gb * Lq * dm * 4
        return b
    best = 1
    for gb in range(1, B + 1):
        if B % gb:
            continue
        if B >= 2 and B // gb < 2:              # keep >= 2 steps (megacore / pipelining)
            continue
        if est(gb) <= budget:
            best = gb
    return best
    # TODO(synk): for very long sequences even gb=1 can exceed a 64 MiB-class VMEM; add a
    # query-axis (Lq) grid dimension in that regime.


def _mha_fc_call(qkv_perm, mask_i8, wfc_h, bfc, *, d_k, attn_dtype, out_dtype,
                 vmem_budget, buffered):
    H, B, Lq, dk = qkv_perm.shape
    dm = wfc_h.shape[-1]
    Lk = mask_i8.shape[-1]
    gb = _pick_attn_group(B, H, Lq, Lk, dk, dm, jnp.dtype(attn_dtype).itemsize, vmem_budget)
    grid = (B // gb,)

    kernel = functools.partial(_attn_fc_kernel, inv_norm=1.0 / math.sqrt(d_k))

    return pl.pallas_call(
        kernel,
        out_shape=(
            jax.ShapeDtypeStruct((B, Lq, dm), out_dtype),       # fc(attn_out) + bfc  (bf16)
            jax.ShapeDtypeStruct((H, B, Lq, Lk), attn_dtype),   # attention probabilities
        ),
        grid=grid,
        in_specs=[
            pl.BlockSpec((H, gb, Lq, dk), lambda i: (0, i, 0, 0)),  # Q == K == V, passed once
            pl.BlockSpec((gb, Lq, Lk), lambda i: (i, 0, 0)),        # int8 mask rows of the group
            _const_spec((H, dk, dm), buffered),                     # fc weight, per-head slices
            _const_spec((1, dm), buffered),                         # fc bias
        ],
        out_specs=(
            pl.BlockSpec((gb, Lq, dm), lambda i: (i, 0, 0)),        # lane-dense d_model store
            pl.BlockSpec((H, gb, Lq, Lk), lambda i: (0, i, 0, 0)),
        ),
        compiler_params=pltpu.CompilerParams(
            dimension_semantics=("parallel",),
            vmem_limit_bytes=vmem_budget),
    )(qkv_perm, mask_i8, wfc_h, bfc)


# --------------------------------------------------------------------------------------
# Kernel B: +residual -> LayerNorm -> *non_pad_mask -> CNNFeed (1x1 conv, relu, 1x1 conv)
#           -> +residual -> LayerNorm -> *non_pad_mask.
# Grid: (batch, Lq-tiles).  Residual / output live as lane-dense column blocks of the
# time-major (Lq, B*d_model) view, so no layout copies are needed around this kernel.
# --------------------------------------------------------------------------------------
def _post_ffn_kernel(y_ref, res_ref, npm_ref,
                     g1_ref, be1_ref, w1_ref, bw1_ref, w2_ref, bw2_ref, g2_ref, be2_ref,
                     out_ref):
    eps = jnp.float32(1e-5)
    y = y_ref[0].astype(jnp.float32)          # (T, d)  fc(attn) + bfc from kernel A (bf16)
    res = res_ref[...]                        # (T, d)  f32 residual (= enc_input rows)
    npm = npm_ref[0]                          # (T, 1)  f32 non-pad mask

    # MHA tail: + residual -> LayerNorm, then EncoderLayer's enc_output *= non_pad_mask
    z = y + res
    mu = jnp.mean(z, axis=-1, keepdims=True)
    var = jnp.mean(jnp.square(z - mu), axis=-1, keepdims=True)
    z = (z - mu) * jax.lax.rsqrt(var + eps) * g1_ref[...] + be1_ref[...]
    z = z * npm

    # CNNFeed: kernel-size-1 Conv1d == pointwise linear over channels (bf16 MXU, f32 acc)
    h = jnp.dot(z.astype(jnp.bfloat16), w1_ref[...],
                preferred_element_type=jnp.float32) + bw1_ref[...]
    h = jnp.maximum(h, 0.0)
    f = jnp.dot(h.astype(jnp.bfloat16), w2_ref[...],
                preferred_element_type=jnp.float32) + bw2_ref[...]

    # + residual -> LayerNorm -> * non_pad_mask
    z2 = f + z
    mu2 = jnp.mean(z2, axis=-1, keepdims=True)
    var2 = jnp.mean(jnp.square(z2 - mu2), axis=-1, keepdims=True)
    z2 = (z2 - mu2) * jax.lax.rsqrt(var2 + eps) * g2_ref[...] + be2_ref[...]

    out_ref[...] = (z2 * npm).astype(out_ref.dtype)       # lane-dense (T, d) store


def _pick_ffn_tile(Lq, dm, d_hid, budget):
    def est(t):
        b = 2 * t * dm * 2                               # fc output in (bf16)
        b += 2 * t * dm * 4                              # residual in (f32)
        b += 2 * t * 4                                   # non-pad mask
        b += 2 * t * dm * 4                              # output (f32)
        b += 2 * (dm * d_hid + d_hid * dm) * 2           # weights (worst case: double-buffered)
        b += t * (3 * dm + d_hid) * 4                    # LN / FFN temporaries
        return b
    for t in (1024, 512, 256, 128, 64, 32, 16, 8):
        if t <= Lq and Lq % t == 0 and est(t) <= budget:
            return t
    return Lq if Lq < 8 else 8


def _post_ffn_call(y, enc_input, non_pad_mask, kp, *, row_tile, vmem_budget, buffered,
                   out_dtype=jnp.float32):
    B, Lq, dm = y.shape
    d_hid = kp["w1"].shape[1]
    assert dm % 128 == 0, (
        "post-attention FFN kernel keeps the time-major residual/output as lane-dense "
        "(Lq, B*d_model) column blocks, which requires d_model % 128 == 0")
    # TODO(synk): add a transpose-based fallback path for d_model not a multiple of 128.

    if row_tile is None:
        tl = _pick_ffn_tile(Lq, dm, d_hid, vmem_budget)
    else:
        tl = min(int(row_tile), Lq)
        if tl < Lq:
            tl = max(8, (tl // 8) * 8)
        tl = min(tl, Lq)
    grid = (B, pl.cdiv(Lq, tl))

    res2d = enc_input.reshape(Lq, B * dm)                                  # free view
    npm_t = jnp.transpose(non_pad_mask.astype(jnp.float32), (1, 0, 2))    # (B, Lq, 1), tiny

    out2d = pl.pallas_call(
        _post_ffn_kernel,
        out_shape=jax.ShapeDtypeStruct((Lq, B * dm), out_dtype),
        grid=grid,
        in_specs=[
            pl.BlockSpec((1, tl, dm), lambda b, j: (b, j, 0)),   # fc output from kernel A
            pl.BlockSpec((tl, dm), lambda b, j: (j, b)),         # f32 residual (time-major column)
            pl.BlockSpec((1, tl, 1), lambda b, j: (b, j, 0)),    # non-pad mask
            _const_spec((1, dm), buffered),                      # gamma1
            _const_spec((1, dm), buffered),                      # beta1
            _const_spec((dm, d_hid), buffered),                  # conv1 weight (1x1 conv == linear)
            _const_spec((1, d_hid), buffered),                   # conv1 bias
            _const_spec((d_hid, dm), buffered),                  # conv2 weight
            _const_spec((1, dm), buffered),                      # conv2 bias
            _const_spec((1, dm), buffered),                      # gamma2
            _const_spec((1, dm), buffered),                      # beta2
        ],
        out_specs=pl.BlockSpec((tl, dm), lambda b, j: (j, b)),   # lane-dense time-major store
        compiler_params=pltpu.CompilerParams(
            dimension_semantics=("parallel", "parallel"),
            vmem_limit_bytes=vmem_budget),
    )(y, res2d, npm_t,
      kp["g1"], kp["be1"], kp["w1"], kp["bw1"], kp["w2"], kp["bw2"], kp["g2"], kp["be2"])

    return out2d.reshape(Lq, B, dm)


# --------------------------------------------------------------------------------------
# Parameter prep (one-time) and EncoderLayer forward.
# --------------------------------------------------------------------------------------
def make_kernel_params(params, n_head, d_k):
    """One-time prep: reshape fc.weight^T into per-head (d_k, d_model) slices and pre-cast
    all matmul weights to bf16 (no per-forward convert+materialize of the weights)."""
    return {
        "wfc_h": params["wfc"].reshape(n_head, d_k, -1).astype(jnp.bfloat16),
        "bfc": params["bfc"].astype(jnp.float32),
        "g1": params["g1"], "be1": params["be1"],
        "w1": params["w1"].astype(jnp.bfloat16), "bw1": params["bw1"],
        "w2": params["w2"].astype(jnp.bfloat16), "bw2": params["bw2"],
        "g2": params["g2"], "be2": params["be2"],
    }


def encoder_layer_forward(kparams, enc_input, non_pad_mask, slf_attn_mask, n_head, d_k,
                          *, attn_dtype=jnp.bfloat16, row_tile=None):
    """enc_input: (len_q, sz_b, d_model) time-major, exactly as the PyTorch module expects.
    Returns (enc_output f32 (len_q, sz_b, d_model),
             attn (sz_b*n_head, len_q, len_q) in attn_dtype; bf16 by default to halve the
             dominant O(Lq^2) HBM writeback -- pass jnp.float32 for exact interface parity)."""
    Lq, B, dm = enc_input.shape
    H = n_head
    vmem_budget = _vmem_budget_bytes()

    # Head split exactly as the PyTorch forward (split slice j = b*n_head + h), one fused
    # bf16 XLA copy.  The trailing reshape to (H, B, Lq, d_k) is free and pairs axis0/axis1
    # as (j // B, j % B) -- exactly the pairing PyTorch's `.view(n_head, sz_b, ...)` un-split
    # uses -- which is what lets kernel A fuse the fc projection with no un-split transpose.
    # (A pl.ds-based in-kernel head split is incompatible with that fused grouping, so the
    #  single wrapper transpose is kept.)
    x16 = enc_input.astype(jnp.bfloat16)
    qkv = jnp.transpose(x16, (1, 0, 2)).reshape(B, Lq, H, d_k)
    qkv = jnp.transpose(qkv, (0, 2, 1, 3)).reshape(B * H, Lq, d_k)
    qkv = qkv.reshape(H, B, Lq, d_k)              # free; [h', b'] = bmm slice h'*B + b'

    # Original (B, Lq, Lk) mask as int8: no n_head-tiled HBM copy, 4x fewer bytes than i32.
    mask_i8 = slf_attn_mask.astype(jnp.int8)

    y, attn4 = _with_buffered_fallback(
        _mha_fc_call, qkv, mask_i8, kparams["wfc_h"], kparams["bfc"],
        d_k=d_k, attn_dtype=attn_dtype, out_dtype=jnp.bfloat16, vmem_budget=vmem_budget)

    # (H, B, Lq, Lk) flattens straight into the PyTorch bmm-slice order j = h'*B + b' (free).
    attn = attn4.reshape(B * H, Lq, attn4.shape[-1])

    enc_out = _with_buffered_fallback(
        _post_ffn_call, y, enc_input, non_pad_mask, kparams,
        row_tile=row_tile, vmem_budget=vmem_budget)
    return enc_out, attn


# --------------------------------------------------------------------------------------
# Pure-JAX reference mirroring the PyTorch graph (and the kernels' bf16 rounding points).
# --------------------------------------------------------------------------------------
def reference_forward(params, enc_input, non_pad_mask, slf_attn_mask, n_head, d_k):
    bf16 = jnp.bfloat16
    Lq, B, dm = enc_input.shape
    H = n_head

    q = jnp.transpose(enc_input, (1, 0, 2)).reshape(B, Lq, H, d_k)
    q = jnp.transpose(q, (0, 2, 1, 3)).reshape(B * H, Lq, d_k).astype(bf16)
    mask_rep = jnp.tile(slf_attn_mask, (H, 1, 1))          # torch mask.repeat(n_head,1,1)
    s = jnp.einsum("bld,bmd->blm", q, q, preferred_element_type=jnp.float32) / np.sqrt(d_k)
    s = jnp.where(mask_rep, -1e9, s)
    attn = jax.nn.softmax(s, axis=2)
    o = jnp.einsum("blm,bmd->bld", attn.astype(bf16), q, preferred_element_type=jnp.float32)

    # torch "un-split": view(n_head, sz_b, Lq, d_k).permute(1,2,0,3).view(sz_b, Lq, -1)
    o = o.reshape(H, B, Lq, d_k)
    ocat = jnp.transpose(o, (1, 2, 0, 3)).reshape(B, Lq, dm)

    y = jnp.einsum("bld,de->ble", ocat.astype(bf16), params["wfc"].astype(bf16),
                   preferred_element_type=jnp.float32) + params["bfc"]
    y = y.astype(bf16).astype(jnp.float32)                 # mirror the bf16 inter-kernel handoff
    y = jnp.transpose(y, (1, 0, 2))                        # transpose(0,1) -> (Lq, B, dm)

    def ln(t, g, b):
        mu = jnp.mean(t, -1, keepdims=True)
        var = jnp.mean(jnp.square(t - mu), -1, keepdims=True)
        return (t - mu) * jax.lax.rsqrt(var + 1e-5) * g + b

    npm = non_pad_mask.astype(jnp.float32)
    z = ln(y + enc_input, params["g1"], params["be1"]) * npm
    h = jnp.maximum(
        jnp.einsum("lbd,de->lbe", z.astype(bf16), params["w1"].astype(bf16),
                   preferred_element_type=jnp.float32) + params["bw1"], 0.0)
    f = jnp.einsum("lbd,de->lbe", h.astype(bf16), params["w2"].astype(bf16),
                   preferred_element_type=jnp.float32) + params["bw2"]
    z2 = ln(f + z, params["g2"], params["be2"]) * npm
    return z2, attn


# --------------------------------------------------------------------------------------
if __name__ == "__main__":
    # Small shapes consistent with the module (d_model is a multiple of 128 for the
    # lane-dense time-major column blocks in kernel B).
    len_q, sz_b = 16, 4
    d_model, n_head = 128, 4
    d_k = d_model // n_head
    d_hid = d_model                 # EncoderLayer uses CNNFeed(d_model, d_model)

    key = jax.random.PRNGKey(0)
    ks = jax.random.split(key, 8)

    enc_input = jax.random.normal(ks[0], (len_q, sz_b, d_model), jnp.float32)

    # padding-style masks from per-batch valid lengths
    valid_len = jnp.array([16, 11, 7, 13], dtype=jnp.int32)
    pos = jnp.arange(len_q)
    key_pad = pos[None, :] >= valid_len[:, None]                              # (B, Lk) True = pad
    slf_attn_mask = jnp.broadcast_to(key_pad[:, None, :], (sz_b, len_q, len_q))
    non_pad_mask = (pos[:, None] < valid_len[None, :]).astype(jnp.float32)[..., None]  # (Lq, B, 1)

    # f32 master parameters (w_qs/w_ks/w_vs are unused in the PyTorch forward -> omitted;
    # dropouts are identity in eval mode)
    params = {
        "wfc": jax.random.normal(ks[1], (d_model, d_model), jnp.float32) * 0.1,   # fc.weight^T
        "bfc": jax.random.normal(ks[2], (1, d_model), jnp.float32) * 0.05,
        "g1": jnp.ones((1, d_model), jnp.float32),
        "be1": jnp.zeros((1, d_model), jnp.float32),
        "w1": jax.random.normal(ks[3], (d_model, d_hid), jnp.float32) * 0.1,      # conv1 W[:,:,0]^T
        "bw1": jax.random.normal(ks[4], (1, d_hid), jnp.float32) * 0.05,
        "w2": jax.random.normal(ks[5], (d_hid, d_model), jnp.float32) * 0.1,      # conv2 W[:,:,0]^T
        "bw2": jax.random.normal(ks[6], (1, d_model), jnp.float32) * 0.05,
        "g2": jnp.ones((1, d_model), jnp.float32),
        "be2": jnp.zeros((1, d_model), jnp.float32),
    }
    kparams = make_kernel_params(params, n_head, d_k)   # one-time bf16 pre-cast / head reshape

    # row_tile=8 exercises a multi-step (batch, Lq-tiles) 'parallel' grid at the toy size.
    enc_out, attn = encoder_layer_forward(
        kparams, enc_input, non_pad_mask, slf_attn_mask, n_head, d_k, row_tile=8)
    enc_out = jax.block_until_ready(enc_out)
    attn = jax.block_until_ready(attn)

    ref_out, ref_attn = reference_forward(
        params, enc_input, non_pad_mask, slf_attn_mask, n_head, d_k)
    np.testing.assert_allclose(np.asarray(attn.astype(jnp.float32)), np.asarray(ref_attn),
                               atol=1.5e-2, rtol=5e-2)
    np.testing.assert_allclose(np.asarray(enc_out), np.asarray(ref_out), atol=3e-2, rtol=3e-2)

    print("KERNEL_OK")
</pallas_src>

<mosaic_0001>
module attributes {stable_mosaic.version = 11 : i64} {
  func.func @_attn_fc_kernel(%arg0: i32, %arg1: memref<4x2x16x32xbf16, #tpu.memory_space<vmem>>, %arg2: memref<2x16x16xi8, #tpu.memory_space<vmem>>, %arg3: memref<4x32x128xbf16, #tpu.memory_space<vmem>>, %arg4: memref<1x128xf32, #tpu.memory_space<vmem>>, %arg5: memref<2x16x128xbf16, #tpu.memory_space<vmem>>, %arg6: memref<4x2x16x16xbf16, #tpu.memory_space<vmem>>) attributes {dimension_semantics = [#tpu.dimension_semantics<parallel>], iteration_bounds = array<i64: 2>, scalar_prefetch = 0 : i64, scratch_operands = 0 : i64, tpu.core_type = #tpu.core_type<tc>, window_params = [{transform_indices = @transform_0, window_bounds = array<i64: 4, 2, 16, 32>}, {transform_indices = @transform_1, window_bounds = array<i64: 2, 16, 16>}, {pipeline_mode = #tpu.pipeline_mode<synchronous>, transform_indices = @transform_2, window_bounds = array<i64: 4, 32, 128>}, {pipeline_mode = #tpu.pipeline_mode<synchronous>, transform_indices = @transform_3, window_bounds = array<i64: 1, 128>}, {transform_indices = @transform_4, window_bounds = array<i64: 2, 16, 128>}, {transform_indices = @transform_5, window_bounds = array<i64: 4, 2, 16, 16>}]} {
    %c0 = arith.constant 0 : index
    %c0_0 = arith.constant 0 : index
    %c0_1 = arith.constant 0 : index
    %c0_2 = arith.constant 0 : index
    %0 = vector.load %arg1[%c0, %c0_0, %c0_1, %c0_2] : memref<4x2x16x32xbf16, #tpu.memory_space<vmem>>, vector<4x2x16x32xbf16>
    %c0_3 = arith.constant 0 : index
    %c0_4 = arith.constant 0 : index
    %c0_5 = arith.constant 0 : index
    %1 = vector.load %arg2[%c0_3, %c0_4, %c0_5] : memref<2x16x16xi8, #tpu.memory_space<vmem>>, vector<2x16x16xi8>
    %c0_i8 = arith.constant 0 : i8
    %2 = vector.broadcast %c0_i8 : i8 to vector<2x16x16xi8>
    %3 = arith.cmpi ne, %1, %2 : vector<2x16x16xi8>
    %c0_6 = arith.constant 0 : index
    %c0_7 = arith.constant 0 : index
    %c0_8 = arith.constant 0 : index
    %4 = vector.load %arg3[%c0_6, %c0_7, %c0_8] : memref<4x32x128xbf16, #tpu.memory_space<vmem>>, vector<4x32x128xbf16>
    %5 = vector.shape_cast %0 : vector<4x2x16x32xbf16> to vector<8x16x32xbf16>
    %cst = arith.constant dense<0.000000e+00> : vector<8x16x16xf32>
    %6 = tpu.matmul %5, %5, %cst {dimension_numbers = #tpu.dot_dimension_numbers<[2], [2], [1], [1], [0, 0, 0, 1, 1, 1], [0], [0]>} : vector<8x16x32xbf16>, vector<8x16x32xbf16>, vector<8x16x16xf32> -> vector<8x16x16xf32>
    %cst_9 = arith.constant 0.176776692 : f32
    %7 = vector.broadcast %cst_9 : f32 to vector<8x16x16xf32>
    %8 = arith.mulf %6, %7 : vector<8x16x16xf32>
    %9 = vector.shape_cast %8 : vector<8x16x16xf32> to vector<4x2x16x16xf32>
    %10 = vector.shape_cast %3 : vector<2x16x16xi1> to vector<1x2x16x16xi1>
    %cst_10 = arith.constant -1.000000e+09 : f32
    %11 = vector.shape_cast %10 : vector<1x2x16x16xi1> to vector<1x2x16x16xi1>
    %12 = vector.broadcast %11 : vector<1x2x16x16xi1> to vector<4x2x16x16xi1>
    %13 = vector.broadcast %cst_10 : f32 to vector<4x2x16x16xf32>
    %14 = arith.select %12, %13, %9 : vector<4x2x16x16xi1>, vector<4x2x16x16xf32>
    %cst_11 = arith.constant dense<0xFF800000> : vector<4x2x16xf32>
    %15 = vector.multi_reduction <maximumf>, %14, %cst_11 [3] : vector<4x2x16x16xf32> to vector<4x2x16xf32>
    %16 = vector.shape_cast %15 : vector<4x2x16xf32> to vector<4x2x16x1xf32>
    %17 = vector.broadcast %16 : vector<4x2x16x1xf32> to vector<4x2x16x16xf32>
    %18 = arith.subf %14, %17 : vector<4x2x16x16xf32>
    %19 = math.exp %18 : vector<4x2x16x16xf32>
    %cst_12 = arith.constant dense<0.000000e+00> : vector<4x2x16xf32>
    %20 = vector.multi_reduction <add>, %19, %cst_12 [3] : vector<4x2x16x16xf32> to vector<4x2x16xf32>
    %21 = vector.shape_cast %20 : vector<4x2x16xf32> to vector<4x2x16x1xf32>
    %22 = tpu.reciprocal %21 {approx = true} : vector<4x2x16x1xf32> -> vector<4x2x16x1xf32>
    %23 = vector.broadcast %22 : vector<4x2x16x1xf32> to vector<4x2x16x16xf32>
    %24 = arith.mulf %19, %23 : vector<4x2x16x16xf32>
    %25 = arith.truncf %24 : vector<4x2x16x16xf32> to vector<4x2x16x16xbf16>
    %c0_13 = arith.constant 0 : index
    %c0_14 = arith.constant 0 : index
    %c0_15 = arith.constant 0 : index
    %c0_16 = arith.constant 0 : index
    %26 = vector.load %arg6[%c0_13, %c0_14, %c0_15, %c0_16] : memref<4x2x16x16xbf16, #tpu.memory_space<vmem>>, vector<4x2x16x16xbf16>
    tpu.vector_store %arg6[%c0_13, %c0_14, %c0_15, %c0_16], %25 {strides = array<i32>} : memref<4x2x16x16xbf16, #tpu.memory_space<vmem>>, vector<4x2x16x16xbf16>,
    %27 = vector.shape_cast %24 : vector<4x2x16x16xf32> to vector<8x16x16xf32>
    %28 = arith.truncf %27 : vector<8x16x16xf32> to vector<8x16x16xbf16>
    %cst_17 = arith.constant dense<0.000000e+00> : vector<8x16x32xf32>
    %29 = tpu.matmul %28, %5, %cst_17 {dimension_numbers = #tpu.dot_dimension_numbers<[2], [1], [1], [2], [0, 0, 0, 1, 1, 2], [0], [0]>} : vector<8x16x16xbf16>, vector<8x16x32xbf16>, vector<8x16x32xf32> -> vector<8x16x32xf32>
    %30 = vector.shape_cast %29 : vector<8x16x32xf32> to vector<4x32x32xf32>
    %cst_18 = arith.constant 0.000000e+00 : f32
    %31 = vector.broadcast %cst_18 : f32 to vector<32x128xf32>
    %32 = vector.extract_strided_slice %30 {offsets = [0, 0, 0], sizes = [1, 32, 32], strides = [1, 1, 1]} : vector<4x32x32xf32> to vector<1x32x32xf32>
    %33 = vector.shape_cast %32 : vector<1x32x32xf32> to vector<32x32xf32>
    %34 = arith.truncf %33 : vector<32x32xf32> to vector<32x32xbf16>
    %35 = vector.extract_strided_slice %4 {offsets = [0, 0, 0], sizes = [1, 32, 128], strides = [1, 1, 1]} : vector<4x32x128xbf16> to vector<1x32x128xbf16>
    %36 = vector.shape_cast %35 : vector<1x32x128xbf16> to vector<32x128xbf16>
    %cst_19 = arith.constant dense<0.000000e+00> : vector<32x128xf32>
    %37 = tpu.matmul %34, %36, %cst_19 {dimension_numbers = #tpu.dot_dimension_numbers<[1], [0], [0], [1], [0, 0, 1, 1], [], []>} : vector<32x32xbf16>, vector<32x128xbf16>, vector<32x128xf32> -> vector<32x128xf32>
    %38 = arith.addf %31, %37 : vector<32x128xf32>
    %39 = vector.extract_strided_slice %30 {offsets = [1, 0, 0], sizes = [1, 32, 32], strides = [1, 1, 1]} : vector<4x32x32xf32> to vector<1x32x32xf32>
    %40 = vector.shape_cast %39 : vector<1x32x32xf32> to vector<32x32xf32>
    %41 = arith.truncf %40 : vector<32x32xf32> to vector<32x32xbf16>
    %42 = vector.extract_strided_slice %4 {offsets = [1, 0, 0], sizes = [1, 32, 128], strides = [1, 1, 1]} : vector<4x32x128xbf16> to vector<1x32x128xbf16>
    %43 = vector.shape_cast %42 : vector<1x32x128xbf16> to vector<32x128xbf16>
    %cst_20 = arith.constant dense<0.000000e+00> : vector<32x128xf32>
    %44 = tpu.matmul %41, %43, %cst_20 {dimension_numbers = #tpu.dot_dimension_numbers<[1], [0], [0], [1], [0, 0, 1, 1], [], []>} : vector<32x32xbf16>, vector<32x128xbf16>, vector<32x128xf32> -> vector<32x128xf32>
    %45 = arith.addf %38, %44 : vector<32x128xf32>
    %46 = vector.extract_strided_slice %30 {offsets = [2, 0, 0], sizes = [1, 32, 32], strides = [1, 1, 1]} : vector<4x32x32xf32> to vector<1x32x32xf32>
    %47 = vector.shape_cast %46 : vector<1x32x32xf32> to vector<32x32xf32>
    %48 = arith.truncf %47 : vector<32x32xf32> to vector<32x32xbf16>
    %49 = vector.extract_strided_slice %4 {offsets = [2, 0, 0], sizes = [1, 32, 128], strides = [1, 1, 1]} : vector<4x32x128xbf16> to vector<1x32x128xbf16>
    %50 = vector.shape_cast %49 : vector<1x32x128xbf16> to vector<32x128xbf16>
    %cst_21 = arith.constant dense<0.000000e+00> : vector<32x128xf32>
    %51 = tpu.matmul %48, %50, %cst_21 {dimension_numbers = #tpu.dot_dimension_numbers<[1], [0], [0], [1], [0, 0, 1, 1], [], []>} : vector<32x32xbf16>, vector<32x128xbf16>, vector<32x128xf32> -> vector<32x128xf32>
    %52 = arith.addf %45, %51 : vector<32x128xf32>
    %53 = vector.extract_strided_slice %30 {offsets = [3, 0, 0], sizes = [1, 32, 32], strides = [1, 1, 1]} : vector<4x32x32xf32> to vector<1x32x32xf32>
    %54 = vector.shape_cast %53 : vector<1x32x32xf32> to vector<32x32xf32>
    %55 = arith.truncf %54 : vector<32x32xf32> to vector<32x32xbf16>
    %56 = vector.extract_strided_slice %4 {offsets = [3, 0, 0], sizes = [1, 32, 128], strides = [1, 1, 1]} : vector<4x32x128xbf16> to vector<1x32x128xbf16>
    %57 = vector.shape_cast %56 : vector<1x32x128xbf16> to vector<32x128xbf16>
    %cst_22 = arith.constant dense<0.000000e+00> : vector<32x128xf32>
    %58 = tpu.matmul %55, %57, %cst_22 {dimension_numbers = #tpu.dot_dimension_numbers<[1], [0], [0], [1], [0, 0, 1, 1], [], []>} : vector<32x32xbf16>, vector<32x128xbf16>, vector<32x128xf32> -> vector<32x128xf32>
    %59 = arith.addf %52, %58 : vector<32x128xf32>
    %c0_23 = arith.constant 0 : index
    %c0_24 = arith.constant 0 : index
    %60 = vector.load %arg4[%c0_23, %c0_24] : memref<1x128xf32, #tpu.memory_space<vmem>>, vector<1x128xf32>
    %61 = vector.broadcast %60 : vector<1x128xf32> to vector<32x128xf32>
    %62 = arith.addf %59, %61 : vector<32x128xf32>
    %63 = vector.shape_cast %62 : vector<32x128xf32> to vector<2x16x128xf32>
    %64 = arith.truncf %63 : vector<2x16x128xf32> to vector<2x16x128xbf16>
    %c0_25 = arith.constant 0 : index
    %c0_26 = arith.constant 0 : index
    %c0_27 = arith.constant 0 : index
    %65 = vector.load %arg5[%c0_25, %c0_26, %c0_27] : memref<2x16x128xbf16, #tpu.memory_space<vmem>>, vector<2x16x128xbf16>
    tpu.vector_store %arg5[%c0_25, %c0_26, %c0_27], %64 {strides = array<i32>} : memref<2x16x128xbf16, #tpu.memory_space<vmem>>, vector<2x16x128xbf16>,
    return
  }
  func.func @transform_0(%arg0: i32) -> (i32, i32, i32, i32) {
    %c0_i32 = arith.constant 0 : i32
    %c0_i32_0 = arith.constant 0 : i32
    %c0_i32_1 = arith.constant 0 : i32
    %c0_i32_2 = arith.constant 0 : i32
    return %c0_i32, %arg0, %c0_i32_0, %c0_i32_1 : i32, i32, i32, i32
  }
  func.func @transform_1(%arg0: i32) -> (i32, i32, i32) {
    %c0_i32 = arith.constant 0 : i32
    %c0_i32_0 = arith.constant 0 : i32
    %c0_i32_1 = arith.constant 0 : i32
    return %arg0, %c0_i32, %c0_i32_0 : i32, i32, i32
  }
  func.func @transform_2(%arg0: i32) -> (i32, i32, i32) {
    %c0_i32 = arith.constant 0 : i32
    %c0_i32_0 = arith.constant 0 : i32
    %c0_i32_1 = arith.constant 0 : i32
    %c0_i32_2 = arith.constant 0 : i32
    return %c0_i32, %c0_i32_0, %c0_i32_1 : i32, i32, i32
  }
  func.func @transform_3(%arg0: i32) -> (i32, i32) {
    %c0_i32 = arith.constant 0 : i32
    %c0_i32_0 = arith.constant 0 : i32
    %c0_i32_1 = arith.constant 0 : i32
    return %c0_i32, %c0_i32_0 : i32, i32
  }
  func.func @transform_4(%arg0: i32) -> (i32, i32, i32) {
    %c0_i32 = arith.constant 0 : i32
    %c0_i32_0 = arith.constant 0 : i32
    %c0_i32_1 = arith.constant 0 : i32
    return %arg0, %c0_i32, %c0_i32_0 : i32, i32, i32
  }
  func.func @transform_5(%arg0: i32) -> (i32, i32, i32, i32) {
    %c0_i32 = arith.constant 0 : i32
    %c0_i32_0 = arith.constant 0 : i32
    %c0_i32_1 = arith.constant 0 : i32
    %c0_i32_2 = arith.constant 0 : i32
    return %c0_i32, %arg0, %c0_i32_0, %c0_i32_1 : i32, i32, i32, i32
  }
}

module attributes {stable_mosaic.version = 11 : i64} {
  func.func @_attn_fc_kernel(%arg0: i32, %arg1: memref<4x2x16x32xbf16, #tpu.memory_space<vmem>>, %arg2: memref<2x16x16xi8, #tpu.memory_space<vmem>>, %arg3: memref<4x32x128xbf16, #tpu.memory_space<vmem>>, %arg4: memref<1x128xf32, #tpu.memory_space<vmem>>, %arg5: memref<2x16x128xbf16, #tpu.memory_space<vmem>>, %arg6: memref<4x2x16x16xbf16, #tpu.memory_space<vmem>>) attributes {dimension_semantics = [#tpu.dimension_semantics<parallel>], iteration_bounds = array<i64: 2>, scalar_prefetch = 0 : i64, scratch_operands = 0 : i64, tpu.core_type = #tpu.core_type<tc>, window_params = [{transform_indices = @transform_0, window_bounds = array<i64: 4, 2, 16, 32>}, {transform_indices = @transform_1, window_bounds = array<i64: 2, 16, 16>}, {pipeline_mode = #tpu.pipeline_mode<synchronous>, transform_indices = @transform_2, window_bounds = array<i64: 4, 32, 128>}, {pipeline_mode = #tpu.pipeline_mode<synchronous>, transform_indices = @transform_3, window_bounds = array<i64: 1, 128>}, {transform_indices = @transform_4, window_bounds = array<i64: 2, 16, 128>}, {transform_indices = @transform_5, window_bounds = array<i64: 4, 2, 16, 16>}]} {
    %c0 = arith.constant 0 : index
    %c0_0 = arith.constant 0 : index
    %c0_1 = arith.constant 0 : index
    %c0_2 = arith.constant 0 : index
    %0 = vector.load %arg1[%c0, %c0_0, %c0_1, %c0_2] : memref<4x2x16x32xbf16, #tpu.memory_space<vmem>>, vector<4x2x16x32xbf16>
    %c0_3 = arith.constant 0 : index
    %c0_4 = arith.constant 0 : index
    %c0_5 = arith.constant 0 : index
    %1 = vector.load %arg2[%c0_3, %c0_4, %c0_5] : memref<2x16x16xi8, #tpu.memory_space<vmem>>, vector<2x16x16xi8>
    %c0_i8 = arith.constant 0 : i8
    %2 = vector.broadcast %c0_i8 : i8 to vector<2x16x16xi8>
    %3 = arith.cmpi ne, %1, %2 : vector<2x16x16xi8>
    %c0_6 = arith.constant 0 : index
    %c0_7 = arith.constant 0 : index
    %c0_8 = arith.constant 0 : index
    %4 = vector.load %arg3[%c0_6, %c0_7, %c0_8] : memref<4x32x128xbf16, #tpu.memory_space<vmem>>, vector<4x32x128xbf16>
    %5 = vector.shape_cast %0 : vector<4x2x16x32xbf16> to vector<8x16x32xbf16>
    %cst = arith.constant dense<0.000000e+00> : vector<8x16x16xf32>
    %6 = tpu.matmul %5, %5, %cst {dimension_numbers = #tpu.dot_dimension_numbers<[2], [2], [1], [1], [0, 0, 0, 1, 1, 1], [0], [0]>} : vector<8x16x32xbf16>, vector<8x16x32xbf16>, vector<8x16x16xf32> -> vector<8x16x16xf32>
    %cst_9 = arith.constant 0.176776692 : f32
    %7 = vector.broadcast %cst_9 : f32 to vector<8x16x16xf32>
    %8 = arith.mulf %6, %7 : vector<8x16x16xf32>
    %9 = vector.shape_cast %8 : vector<8x16x16xf32> to vector<4x2x16x16xf32>
    %10 = vector.shape_cast %3 : vector<2x16x16xi1> to vector<1x2x16x16xi1>
    %cst_10 = arith.constant -1.000000e+09 : f32
    %11 = vector.shape_cast %10 : vector<1x2x16x16xi1> to vector<1x2x16x16xi1>
    %12 = vector.broadcast %11 : vector<1x2x16x16xi1> to vector<4x2x16x16xi1>
    %13 = vector.broadcast %cst_10 : f32 to vector<4x2x16x16xf32>
    %14 = arith.select %12, %13, %9 : vector<4x2x16x16xi1>, vector<4x2x16x16xf32>
    %cst_11 = arith.constant dense<0xFF800000> : vector<4x2x16xf32>
    %15 = vector.multi_reduction <maximumf>, %14, %cst_11 [3] : vector<4x2x16x16xf32> to vector<4x2x16xf32>
    %16 = vector.shape_cast %15 : vector<4x2x16xf32> to vector<4x2x16x1xf32>
    %17 = vector.broadcast %16 : vector<4x2x16x1xf32> to vector<4x2x16x16xf32>
    %18 = arith.subf %14, %17 : vector<4x2x16x16xf32>
    %19 = math.exp %18 : vector<4x2x16x16xf32>
    %cst_12 = arith.constant dense<0.000000e+00> : vector<4x2x16xf32>
    %20 = vector.multi_reduction <add>, %19, %cst_12 [3] : vector<4x2x16x16xf32> to vector<4x2x16xf32>
    %21 = vector.shape_cast %20 : vector<4x2x16xf32> to vector<4x2x16x1xf32>
    %22 = tpu.reciprocal %21 {approx = true} : vector<4x2x16x1xf32> -> vector<4x2x16x1xf32>
    %23 = vector.broadcast %22 : vector<4x2x16x1xf32> to vector<4x2x16x16xf32>
    %24 = arith.mulf %19, %23 : vector<4x2x16x16xf32>
    %25 = arith.truncf %24 : vector<4x2x16x16xf32> to vector<4x2x16x16xbf16>
    %c0_13 = arith.constant 0 : index
    %c0_14 = arith.constant 0 : index
    %c0_15 = arith.constant 0 : index
    %c0_16 = arith.constant 0 : index
    %26 = vector.load %arg6[%c0_13, %c0_14, %c0_15, %c0_16] : memref<4x2x16x16xbf16, #tpu.memory_space<vmem>>, vector<4x2x16x16xbf16>
    tpu.vector_store %arg6[%c0_13, %c0_14, %c0_15, %c0_16], %25 {strides = array<i32>} : memref<4x2x16x16xbf16, #tpu.memory_space<vmem>>, vector<4x2x16x16xbf16>,
    %27 = vector.shape_cast %24 : vector<4x2x16x16xf32> to vector<8x16x16xf32>
    %28 = arith.truncf %27 : vector<8x16x16xf32> to vector<8x16x16xbf16>
    %cst_17 = arith.constant dense<0.000000e+00> : vector<8x16x32xf32>
    %29 = tpu.matmul %28, %5, %cst_17 {dimension_numbers = #tpu.dot_dimension_numbers<[2], [1], [1], [2], [0, 0, 0, 1, 1, 2], [0], [0]>} : vector<8x16x16xbf16>, vector<8x16x32xbf16>, vector<8x16x32xf32> -> vector<8x16x32xf32>
    %30 = vector.shape_cast %29 : vector<8x16x32xf32> to vector<4x32x32xf32>
    %cst_18 = arith.constant 0.000000e+00 : f32
    %31 = vector.broadcast %cst_18 : f32 to vector<32x128xf32>
    %32 = vector.extract_strided_slice %30 {offsets = [0, 0, 0], sizes = [1, 32, 32], strides = [1, 1, 1]} : vector<4x32x32xf32> to vector<1x32x32xf32>
    %33 = vector.shape_cast %32 : vector<1x32x32xf32> to vector<32x32xf32>
    %34 = arith.truncf %33 : vector<32x32xf32> to vector<32x32xbf16>
    %35 = vector.extract_strided_slice %4 {offsets = [0, 0, 0], sizes = [1, 32, 128], strides = [1, 1, 1]} : vector<4x32x128xbf16> to vector<1x32x128xbf16>
    %36 = vector.shape_cast %35 : vector<1x32x128xbf16> to vector<32x128xbf16>
    %cst_19 = arith.constant dense<0.000000e+00> : vector<32x128xf32>
    %37 = tpu.matmul %34, %36, %cst_19 {dimension_numbers = #tpu.dot_dimension_numbers<[1], [0], [0], [1], [0, 0, 1, 1], [], []>} : vector<32x32xbf16>, vector<32x128xbf16>, vector<32x128xf32> -> vector<32x128xf32>
    %38 = arith.addf %31, %37 : vector<32x128xf32>
    %39 = vector.extract_strided_slice %30 {offsets = [1, 0, 0], sizes = [1, 32, 32], strides = [1, 1, 1]} : vector<4x32x32xf32> to vector<1x32x32xf32>
    %40 = vector.shape_cast %39 : vector<1x32x32xf32> to vector<32x32xf32>
    %41 = arith.truncf %40 : vector<32x32xf32> to vector<32x32xbf16>
    %42 = vector.extract_strided_slice %4 {offsets = [1, 0, 0], sizes = [1, 32, 128], strides = [1, 1, 1]} : vector<4x32x128xbf16> to vector<1x32x128xbf16>
    %43 = vector.shape_cast %42 : vector<1x32x128xbf16> to vector<32x128xbf16>
    %cst_20 = arith.constant dense<0.000000e+00> : vector<32x128xf32>
    %44 = tpu.matmul %41, %43, %cst_20 {dimension_numbers = #tpu.dot_dimension_numbers<[1], [0], [0], [1], [0, 0, 1, 1], [], []>} : vector<32x32xbf16>, vector<32x128xbf16>, vector<32x128xf32> -> vector<32x128xf32>
    %45 = arith.addf %38, %44 : vector<32x128xf32>
    %46 = vector.extract_strided_slice %30 {offsets = [2, 0, 0], sizes = [1, 32, 32], strides = [1, 1, 1]} : vector<4x32x32xf32> to vector<1x32x32xf32>
    %47 = vector.shape_cast %46 : vector<1x32x32xf32> to vector<32x32xf32>
    %48 = arith.truncf %47 : vector<32x32xf32> to vector<32x32xbf16>
    %49 = vector.extract_strided_slice %4 {offsets = [2, 0, 0], sizes = [1, 32, 128], strides = [1, 1, 1]} : vector<4x32x128xbf16> to vector<1x32x128xbf16>
    %50 = vector.shape_cast %49 : vector<1x32x128xbf16> to vector<32x128xbf16>
    %cst_21 = arith.constant dense<0.000000e+00> : vector<32x128xf32>
    %51 = tpu.matmul %48, %50, %cst_21 {dimension_numbers = #tpu.dot_dimension_numbers<[1], [0], [0], [1], [0, 0, 1, 1], [], []>} : vector<32x32xbf16>, vector<32x128xbf16>, vector<32x128xf32> -> vector<32x128xf32>
    %52 = arith.addf %45, %51 : vector<32x128xf32>
    %53 = vector.extract_strided_slice %30 {offsets = [3, 0, 0], sizes = [1, 32, 32], strides = [1, 1, 1]} : vector<4x32x32xf32> to vector<1x32x32xf32>
    %54 = vector.shape_cast %53 : vector<1x32x32xf32> to vector<32x32xf32>
    %55 = arith.truncf %54 : vector<32x32xf32> to vector<32x32xbf16>
    %56 = vector.extract_strided_slice %4 {offsets = [3, 0, 0], sizes = [1, 32, 128], strides = [1, 1, 1]} : vector<4x32x128xbf16> to vector<1x32x128xbf16>
    %57 = vector.shape_cast %56 : vector<1x32x128xbf16> to vector<32x128xbf16>
    %cst_22 = arith.constant dense<0.000000e+00> : vector<32x128xf32>
    %58 = tpu.matmul %55, %57, %cst_22 {dimension_numbers = #tpu.dot_dimension_numbers<[1], [0], [0], [1], [0, 0, 1, 1], [], []>} : vector<32x32xbf16>, vector<32x128xbf16>, vector<32x128xf32> -> vector<32x128xf32>
    %59 = arith.addf %52, %58 : vector<32x128xf32>
    %c0_23 = arith.constant 0 : index
    %c0_24 = arith.constant 0 : index
    %60 = vector.load %arg4[%c0_23, %c0_24] : memref<1x128xf32, #tpu.memory_space<vmem>>, vector<1x128xf32>
    %61 = vector.broadcast %60 : vector<1x128xf32> to vector<32x128xf32>
    %62 = arith.addf %59, %61 : vector<32x128xf32>
    %63 = vector.shape_cast %62 : vector<32x128xf32> to vector<2x16x128xf32>
    %64 = arith.truncf %63 : vector<2x16x128xf32> to vector<2x16x128xbf16>
    %c0_25 = arith.constant 0 : index
    %c0_26 = arith.constant 0 : index
    %c0_27 = arith.constant 0 : index
    %65 = vector.load %arg5[%c0_25, %c0_26, %c0_27] : memref<2x16x128xbf16, #tpu.memory_space<vmem>>, vector<2x16x128xbf16>
    tpu.vector_store %arg5[%c0_25, %c0_26, %c0_27], %64 {strides = array<i32>} : memref<2x16x128xbf16, #tpu.memory_space<vmem>>, vector<2x16x128xbf16>,
    return
  }
  func.func @transform_0(%arg0: i32) -> (i32, i32, i32, i32) {
    %c0_i32 = arith.constant 0 : i32
    %c0_i32_0 = arith.constant 0 : i32
    %c0_i32_1 = arith.constant 0 : i32
    %c0_i32_2 = arith.constant 0 : i32
    return %c0_i32, %arg0, %c0_i32_0, %c0_i32_1 : i32, i32, i32, i32
  }
  func.func @transform_1(%arg0: i32) -> (i32, i32, i32) {
    %c0_i32 = arith.constant 0 : i32
    %c0_i32_0 = arith.constant 0 : i32
    %c0_i32_1 = arith.constant 0 : i32
    return %arg0, %c0_i32, %c0_i32_0 : i32, i32, i32
  }
  func.func @transform_2(%arg0: i32) -> (i32, i32, i32) {
    %c0_i32 = arith.constant 0 : i32
    %c0_i32_0 = arith.constant 0 : i32
    %c0_i32_1 = arith.constant 0 : i32
    %c0_i32_2 = arith.constant 0 : i32
    return %c0_i32, %c0_i32_0, %c0_i32_1 : i32, i32, i32
  }
  func.func @transform_3(%arg0: i32) -> (i32, i32) {
    %c0_i32 = arith.constant 0 : i32
    %c0_i32_0 = arith.constant 0 : i32
    %c0_i32_1 = arith.constant 0 : i32
    return %c0_i32, %c0_i32_0 : i32, i32
  }
  func.func @transform_4(%arg0: i32) -> (i32, i32, i32) {
    %c0_i32 = arith.constant 0 : i32
    %c0_i32_0 = arith.constant 0 : i32
    %c0_i32_1 = arith.constant 0 : i32
    return %arg0, %c0_i32, %c0_i32_0 : i32, i32, i32
  }
  func.func @transform_5(%arg0: i32) -> (i32, i32, i32, i32) {
    %c0_i32 = arith.constant 0 : i32
    %c0_i32_0 = arith.constant 0 : i32
    %c0_i32_1 = arith.constant 0 : i32
    %c0_i32_2 = arith.constant 0 : i32
    return %c0_i32, %arg0, %c0_i32_0, %c0_i32_1 : i32, i32, i32, i32
  }
}

</mosaic_0001>

<llo_original>
// kernel: tpu_custom_call.1
$region0: #{tpu_custom_call.1}
  #allocation0 [shape = 'u32[]', space=smem, size = 0x4, offset = 0x4, fixed_abs, tag = 'smem constant byte address 0x4 - core index']
  #allocation1 [shape = 'u32[72,128]{1,0:T(1,128)}', space=vmem, size = 0x9000, scoped, tag = 'internal scratch']
  #allocation11 [shape = 's32[]', space=sflag, size = 0x4, offset = 0, fixed_abs, tag = 'sflag constant byte address 0x0 - dummy sync flag']
  #allocation13 [shape = 's32[]', space=sflag, size = 0x4, offset = 0, fixed_abs, tag = 'sflag constant byte address 0x0 - dummy sync flag']
  %s0 = inlined_call_operand.hbm [shape: bf16[4,4,16,32], index: 0, kind: input, shape index: {}]
  %s1 = inlined_call_operand.hbm [shape: s8[4,16,16], index: 1, kind: input, shape index: {}]
  %s2 = inlined_call_operand.hbm [shape: bf16[4,32,128], index: 2, kind: input, shape index: {}]
  %s3 = inlined_call_operand.vmem [shape: f32[1,128], index: 3, kind: input, shape index: {}]
  %s4 = inlined_call_operand.hbm [shape: bf16[4,16,128], index: 4, kind: output, shape index: {0}]
  %s5 = inlined_call_operand.hbm [shape: bf16[4,4,16,16], index: 5, kind: output, shape index: {1}]
  %6 = xla_tuple %s4, %s5
  %s7 = sld [smem:[#allocation0]]
  $region69: #{tpu_custom_call.1} parent=0
    _
  %s9 = ssub.s32 1, %s7
  %s10 = scalar_select 0, %s9, %s7
  $region1: #{tpu_custom_call.1} parent=0
    #allocation2 [shape = 'u8[65536]{0}', space=vmem, size = 0x10000, scoped, tag = 'input window, operand 0']
    #allocation3 [shape = 's32[2]{0}', space=sflag, size = 0x8, scoped, tag = 'scoped memory for tpu_custom_call.1']
    #allocation4 [shape = 's32[2]{0}', space=sflag, size = 0x8, scoped, tag = 'scoped memory for tpu_custom_call.1']
    #allocation5 [shape = 'u8[8192]{0}', space=vmem, size = 0x2000, scoped, tag = 'input window, operand 1']
    #allocation6 [shape = 's32[2]{0}', space=sflag, size = 0x8, scoped, tag = 'scoped memory for tpu_custom_call.1']
    #allocation7 [shape = 'u8[32768]{0}', space=vmem, size = 0x8000, scoped, tag = 'input window, operand 2, single buffered']
    #allocation8 [shape = 'u8[16384]{0}', space=vmem, size = 0x4000, scoped, tag = 'output window, operand 0']
    #allocation9 [shape = 'u8[65536]{0}', space=vmem, size = 0x10000, scoped, tag = 'output window, operand 1']
    #allocation10 [shape = 's32[2]{0}', space=sflag, size = 0x8, scoped, tag = 'scoped memory for tpu_custom_call.1']
    %11 = vsyncpa [#allocation3], 0
    %s12 = scalar_lea.sflag [#allocation3], 1
    %13 = vsyncpa %s12, 0
    %14 = vsyncpa [#allocation6], 0
    %s15 = scalar_lea.sflag [#allocation6], 1
    %16 = vsyncpa %s15, 0
    %17 = vsyncpa [#allocation4], 0
    %s18 = scalar_lea.sflag [#allocation4], 1
    %19 = vsyncpa %s18, 0
    %20 = vsyncpa [#allocation10], 0
    %s21 = scalar_lea.sflag [#allocation10], 1
    %22 = vsyncpa %s21, 0
    loop: start=0, step=1, limit=4
    $region2: #{tpu_custom_call.1} parent=1 // loop_pre_header
      _
    $region3: #{tpu_custom_call.1} parent=1 // loop_header
      %s24 = sphi 0, %s28
      %p25 = scmp.ge.s32.totalorder %s24, 4
      %s34 = sphi 0, %s36
      %s37 = sphi 0, %s34
      %s38 = sphi 0, %s37
      %s54 = sphi 0, %s38
      %s60 = sphi 0, %s62
      %s63 = sphi 0, %s60
      %s64 = sphi 0, %s63
      %s80 = sphi 0, %s64
      %s84 = sphi 0, %s84
      %s86 = sphi 0, %s84
      %s87 = sphi 0, %s86
      %s101 = sphi 0, %s87
      %s105 = sphi 0, %s105
      %s107 = sphi 0, %s105
      %s108 = sphi 0, %s107
      %s122 = sphi 0, %s108
      %s128 = sphi 0, %s130
      %s131 = sphi 0, %s128
      %s132 = sphi 0, %s131
      %s148 = sphi 0, %s132
      %s154 = sphi 0, %s156
      %s157 = sphi 0, %s154
      %s158 = sphi 0, %s157
      %s174 = sphi 0, %s158
    $region4: #{tpu_custom_call.1} parent=1 // loop_header_branch
      %27 = sbr.rel (%p25) target = $region8
    $region5: #{tpu_custom_call.1} parent=1 // loop_body
      %s29 = ssub.s32 %s24, 1
      %s30 = ssub.s32 %s24, 2
      %s31 = sadd.s32 %s24, 1
      %s32 = ssub.s32 %s24, %s31
      %p33 = scmp.eq.s32.totalorder %s32, 0
      %s35 = sadd.s32 %s34, 1
      %s36 = scalar_select %p33, %s34, %s35
      %p39 = pneg %p33
      %p40 = scmp.eq.s32.totalorder %s24, 1
      %p41 = por %p39, %p40
      %p42 = scmp.ne.s32.totalorder %s34, %s37
      %p43 = scmp.eq.s32.totalorder %s24, 0
      %p44 = por %p42, %p43
      %p45 = scmp.ne.s32.totalorder %s34, %s37
      %p46 = scmp.eq.s32.totalorder %s29, 1
      %p47 = por %p45, %p46
      %p48 = scmp.ne.s32.totalorder %s37, %s38
      %p49 = scmp.eq.s32.totalorder %s29, 0
      %p50 = por %p48, %p49
      %p51 = scmp.ne.s32.totalorder %s37, %s38
      %p52 = scmp.eq.s32.totalorder %s30, 1
      %p53 = por %p51, %p52
      %p55 = scmp.ne.s32.totalorder %s38, %s54
      %p56 = scmp.eq.s32.totalorder %s30, 0
      %p57 = por %p55, %p56
      %s58 = ssub.s32 %s24, %s31
      %p59 = scmp.eq.s32.totalorder %s58, 0
      %s61 = sadd.s32 %s60, 1
      %s62 = scalar_select %p59, %s60, %s61
      %p65 = pneg %p59
      %p66 = scmp.eq.s32.totalorder %s24, 1
      %p67 = por %p65, %p66
      %p68 = scmp.ne.s32.totalorder %s60, %s63
      %p69 = scmp.eq.s32.totalorder %s24, 0
      %p70 = por %p68, %p69
      %p71 = scmp.ne.s32.totalorder %s60, %s63
      %p72 = scmp.eq.s32.totalorder %s29, 1
      %p73 = por %p71, %p72
      %p74 = scmp.ne.s32.totalorder %s63, %s64
      %p75 = scmp.eq.s32.totalorder %s29, 0
      %p76 = por %p74, %p75
      %p77 = scmp.ne.s32.totalorder %s63, %s64
      %p78 = scmp.eq.s32.totalorder %s30, 1
      %p79 = por %p77, %p78
      %p81 = scmp.ne.s32.totalorder %s64, %s80
      %p82 = scmp.eq.s32.totalorder %s30, 0
      %p83 = por %p81, %p82
      %s85 = sadd.s32 %s84, 1
      %p88 = scmp.eq.s32.totalorder %s24, 1
      %p89 = scmp.ne.s32.totalorder %s84, %s86
      %p90 = scmp.eq.s32.totalorder %s24, 0
      %p91 = por %p89, %p90
      %p92 = scmp.ne.s32.totalorder %s84, %s86
      %p93 = scmp.eq.s32.totalorder %s29, 1
      %p94 = por %p92, %p93
      %p95 = scmp.ne.s32.totalorder %s86, %s87
      %p96 = scmp.eq.s32.totalorder %s29, 0
      %p97 = por %p95, %p96
      %p98 = scmp.ne.s32.totalorder %s86, %s87
      %p99 = scmp.eq.s32.totalorder %s30, 1
      %p100 = por %p98, %p99
      %p102 = scmp.ne.s32.totalorder %s87, %s101
      %p103 = scmp.eq.s32.totalorder %s30, 0
      %p104 = por %p102, %p103
      %s106 = sadd.s32 %s105, 1
      %p109 = scmp.eq.s32.totalorder %s24, 1
      %p110 = scmp.ne.s32.totalorder %s105, %s107
      %p111 = scmp.eq.s32.totalorder %s24, 0
      %p112 = por %p110, %p111
      %p113 = scmp.ne.s32.totalorder %s105, %s107
      %p114 = scmp.eq.s32.totalorder %s29, 1
      %p115 = por %p113, %p114
      %p116 = scmp.ne.s32.totalorder %s107, %s108
      %p117 = scmp.eq.s32.totalorder %s29, 0
      %p118 = por %p116, %p117
      %p119 = scmp.ne.s32.totalorder %s107, %s108
      %p120 = scmp.eq.s32.totalorder %s30, 1
      %p121 = por %p119, %p120
      %p123 = scmp.ne.s32.totalorder %s108, %s122
      %p124 = scmp.eq.s32.totalorder %s30, 0
      %p125 = por %p123, %p124
      %s126 = ssub.s32 %s24, %s31
      %p127 = scmp.eq.s32.totalorder %s126, 0
      %s129 = sadd.s32 %s128, 1
      %s130 = scalar_select %p127, %s128, %s129
      %p133 = pneg %p127
      %p134 = scmp.eq.s32.totalorder %s24, 1
      %p135 = por %p133, %p134
      %p136 = scmp.ne.s32.totalorder %s128, %s131
      %p137 = scmp.eq.s32.totalorder %s24, 0
      %p138 = por %p136, %p137
      %p139 = scmp.ne.s32.totalorder %s128, %s131
      %p140 = scmp.eq.s32.totalorder %s29, 1
      %p141 = por %p139, %p140
      %p142 = scmp.ne.s32.totalorder %s131, %s132
      %p143 = scmp.eq.s32.totalorder %s29, 0
      %p144 = por %p142, %p143
      %p145 = scmp.ne.s32.totalorder %s131, %s132
      %p146 = scmp.eq.s32.totalorder %s30, 1
      %p147 = por %p145, %p146
      %p149 = scmp.ne.s32.totalorder %s132, %s148
      %p150 = scmp.eq.s32.totalorder %s30, 0
      %p151 = por %p149, %p150
      %s152 = ssub.s32 %s24, %s31
      %p153 = scmp.eq.s32.totalorder %s152, 0
      %s155 = sadd.s32 %s154, 1
      %s156 = scalar_select %p153, %s154, %s155
      %p159 = pneg %p153
      %p160 = scmp.eq.s32.totalorder %s24, 1
      %p161 = por %p159, %p160
      %p162 = scmp.ne.s32.totalorder %s154, %s157
      %p163 = scmp.eq.s32.totalorder %s24, 0
      %p164 = por %p162, %p163
      %p165 = scmp.ne.s32.totalorder %s154, %s157
      %p166 = scmp.eq.s32.totalorder %s29, 1
      %p167 = por %p165, %p166
      %p168 = scmp.ne.s32.totalorder %s157, %s158
      %p169 = scmp.eq.s32.totalorder %s29, 0
      %p170 = por %p168, %p169
      %p171 = scmp.ne.s32.totalorder %s157, %s158
      %p172 = scmp.eq.s32.totalorder %s30, 1
      %p173 = por %p171, %p172
      %p175 = scmp.ne.s32.totalorder %s158, %s174
      %p176 = scmp.eq.s32.totalorder %s30, 0
      %p177 = por %p175, %p176
      %p178 = scmp.le.s32.totalorder 1, %s24
      %p179 = scmp.lt.s32.totalorder %s24, 3
      %p180 = pnand %p178, %p179
      %p181 = pneg %p180
      // Predicated region
      $region9: #{tpu_custom_call.1} parent=5 // pred_check
        _
      $region10: #{tpu_custom_call.1} parent=5 // pred_check_branch
        %183 = sbr.rel (%p180) target = $region12
      $region11: #{tpu_custom_call.1} parent=5 // pred_region
        %s184 = ssub.s32 %s24, 1
        // Predicated region
        $region13: #{tpu_custom_call.1} parent=11 // pred_check
          %p185 = pneg %p97
        $region14: #{tpu_custom_call.1} parent=11 // pred_check_branch
          %187 = sbr.rel (%p185) target = $region16
        $region15: #{tpu_custom_call.1} parent=11 // pred_region
          %189 = vsyncadd [#allocation6], 0
          %s190 = sshll.u32 %s2, 4
          %s191 = int_to_ptr.hbm [resolvable:$true] %s190
          %s192 = sshll.u32 [#allocation7], 4
          %s193 = int_to_ptr.vmem [resolvable:$true] %s192
          %198 = dma.hbm_to_vmem [thread:$0]  %s191, 1024, %s193, [#allocation6], 64, 64, 4
        $region16: #{tpu_custom_call.1} parent=11 // pred_fallthru
          _
        // Predicated region
        $region17: #{tpu_custom_call.1} parent=11 // pred_check
          %p199 = pneg %p118
        $region18: #{tpu_custom_call.1} parent=11 // pred_check_branch
          %201 = sbr.rel (%p199) target = $region20
        $region19: #{tpu_custom_call.1} parent=11 // pred_region
          _
        $region20: #{tpu_custom_call.1} parent=11 // pred_fallthru
          _
      $region12: #{tpu_custom_call.1} parent=5 // pred_fallthru
        _
      %p202 = scmp.lt.s32.totalorder %s24, 2
      // Predicated region
      $region21: #{tpu_custom_call.1} parent=5 // pred_check
        %p203 = pneg %p202
      $region22: #{tpu_custom_call.1} parent=5 // pred_check_branch
        %205 = sbr.rel (%p203) target = $region24
      $region23: #{tpu_custom_call.1} parent=5 // pred_region
        // Predicated region
        $region25: #{tpu_custom_call.1} parent=23 // pred_check
          %p206 = pneg %p44
        $region26: #{tpu_custom_call.1} parent=23 // pred_check_branch
          %208 = sbr.rel (%p206) target = $region28
        $region27: #{tpu_custom_call.1} parent=23 // pred_region
          #allocation12 [shape = 'u32[6]{0}', space=smem, size = 0x18, scoped, tag = 'DMA stride descriptor']
          %s209 = sand.u32 %s34, 1
          %s210 = scalar_lea.sflag [#allocation3], %s209
          %s211 = sand.u32 %s34, 1
          %s212 = smul.addr %s211, 64
          %s213 = scalar_lea.vmem [#allocation2], %s212
          %s214 = smul.u32 2, %s24
          %216 = vsyncadd %s210, 0
          %s217 = smul.addr %s214, 2
          %s218 = smul.addr %s217, 4
          %s219 = scalar_lea.hbm %s0, %s218
          %s221 = sshll.u32 1, 14
          %s222 = sxor.u32 4294967295, %s221
          %s224 = sld [smem:[#allocation0]]
          %s225 = sadd.s32 2, %s224
          %s227 = sshll.u32 7, 26
          %s228 = sxor.u32 4294967295, %s227
          %s229 = sand.u32 0, %s228
          %s230 = sshll.u32 %s225, 26
          %s231 = sor.u32 %s229, %s230
          %s232 = sshll.u32 %s219, 4
          %s233 = int_to_ptr.hbm [resolvable:$true] %s232
          %s234 = sshll.u32 %s213, 4
          %s235 = int_to_ptr.vmem [resolvable:$true] %s234
          %241 = sst [smem:[#allocation12]] 512
          %s242 = scalar_lea.smem [#allocation12], 1
          %243 = sst [smem:[%s242]] 256
          %s244 = scalar_lea.smem [#allocation12], 2
          %245 = sst [smem:[%s244]] 4
          %s246 = scalar_lea.smem [#allocation12], 3
          %247 = sst [smem:[%s246]] 64
          %s248 = scalar_lea.smem [#allocation12], 4
          %249 = sst [smem:[%s248]] 64
          %s250 = scalar_lea.smem [#allocation12], 5
          %251 = sst [smem:[%s250]] 4
          %253 = dma.general %s233, 1024, %s235, %s210, [#allocation11], [#allocation12], %s231, 0
        $region28: #{tpu_custom_call.1} parent=23 // pred_fallthru
          _
        // Predicated region
        $region29: #{tpu_custom_call.1} parent=23 // pred_check
          %p254 = pneg %p70
        $region30: #{tpu_custom_call.1} parent=23 // pred_check_branch
          %256 = sbr.rel (%p254) target = $region32
        $region31: #{tpu_custom_call.1} parent=23 // pred_region
          %s257 = sand.u32 %s24, 1
          %s258 = scalar_lea.sflag [#allocation6], %s257
          %s259 = sand.u32 %s60, 1
          %s260 = smul.addr %s259, 8
          %s261 = scalar_lea.vmem [#allocation5], %s260
          %s262 = smul.u32 2, %s24
          %264 = vsyncadd %s258, 0
          %s265 = smul.addr %s262, 2
          %s266 = smul.addr %s265, 2
          %s267 = scalar_lea.hbm %s1, %s266
          %s268 = sshll.u32 %s267, 4
          %s269 = int_to_ptr.hbm [resolvable:$true] %s268
          %s270 = sshll.u32 %s261, 4
          %s271 = int_to_ptr.vmem [resolvable:$true] %s270
          %276 = dma.hbm_to_vmem [thread:$0]  %s269, 128, %s271, %s258, 32, 32, 2
        $region32: #{tpu_custom_call.1} parent=23 // pred_fallthru
          _
      $region24: #{tpu_custom_call.1} parent=5 // pred_fallthru
        _
      %p277 = scmp.le.s32.totalorder 1, %s24
      %p278 = scmp.lt.s32.totalorder %s24, 3
      %p279 = pnand %p277, %p278
      %p280 = pneg %p279
      // Predicated region
      $region33: #{tpu_custom_call.1} parent=5 // pred_check
        _
      $region34: #{tpu_custom_call.1} parent=5 // pred_check_branch
        %282 = sbr.rel (%p279) target = $region36
      $region35: #{tpu_custom_call.1} parent=5 // pred_region
        %s283 = ssub.s32 %s24, 1
        %s284 = sand.u32 %s37, 1
        %s285 = scalar_lea.sflag [#allocation3], %s284
        %s286 = sand.u32 %s37, 1
        %s287 = smul.addr %s286, 64
        %s288 = scalar_lea.vmem [#allocation2], %s287
        // Predicated region
        $region37: #{tpu_custom_call.1} parent=35 // pred_check
          %p289 = pneg %p50
        $region38: #{tpu_custom_call.1} parent=35 // pred_check_branch
          %291 = sbr.rel (%p289) target = $region40
        $region39: #{tpu_custom_call.1} parent=35 // pred_region
          %293 = dma.done %s285, 1024
        $region40: #{tpu_custom_call.1} parent=35 // pred_fallthru
          _
        %s294 = sand.u32 %s29, 1
        %s295 = scalar_lea.sflag [#allocation6], %s294
        %s296 = sand.u32 %s63, 1
        %s297 = smul.addr %s296, 8
        %s298 = scalar_lea.vmem [#allocation5], %s297
        // Predicated region
        $region41: #{tpu_custom_call.1} parent=35 // pred_check
          %p299 = pneg %p76
        $region42: #{tpu_custom_call.1} parent=35 // pred_check_branch
          %301 = sbr.rel (%p299) target = $region44
        $region43: #{tpu_custom_call.1} parent=35 // pred_region
          %303 = dma.done %s295, 128
        $region44: #{tpu_custom_call.1} parent=35 // pred_fallthru
          _
        // Predicated region
        $region45: #{tpu_custom_call.1} parent=35 // pred_check
          %p304 = pneg %p97
        $region46: #{tpu_custom_call.1} parent=35 // pred_check_branch
          %306 = sbr.rel (%p304) target = $region48
        $region47: #{tpu_custom_call.1} parent=35 // pred_region
          %308 = dma.done [#allocation6], 1024
        $region48: #{tpu_custom_call.1} parent=35 // pred_fallthru
          _
        %s309 = sand.u32 %s37, 1
        %s310 = scalar_lea.sflag [#allocation3], %s309
        %s311 = sand.u32 %s37, 1
        %s312 = smul.addr %s311, 64
        %s313 = scalar_lea.vmem [#allocation2], %s312
        %p314 = pneg %p50
        %p315 = pneg %p47
        %s316 = sand.u32 %s29, 1
        %s317 = scalar_lea.sflag [#allocation6], %s316
        %s318 = sand.u32 %s63, 1
        %s319 = smul.addr %s318, 8
        %s320 = scalar_lea.vmem [#allocation5], %s319
        %p321 = pneg %p76
        %p322 = pneg %p73
        %p323 = pneg %p97
        %p324 = pneg %p94
        %p325 = pneg %p118
        %p326 = pneg %p115
        %p327 = pneg %p144
        %p328 = pneg %p141
        %s329 = sand.u32 %s131, 1
        %s330 = scalar_lea.sflag [#allocation4], %s329
        %s331 = sand.u32 %s131, 1
        %s332 = smul.addr %s331, 16
        %s333 = scalar_lea.vmem [#allocation8], %s332
        %p334 = pneg %p170
        %p335 = pneg %p167
        %s336 = sand.u32 %s157, 1
        %s337 = scalar_lea.sflag [#allocation10], %s336
        %s338 = sand.u32 %s157, 1
        %s339 = smul.addr %s338, 64
        %s340 = scalar_lea.vmem [#allocation9], %s339
        %s341 = smul.u32 2, %s29
        %s342 = smul.u32 2, %s29
        %s343 = smul.u32 2, %s29
        %s344 = smul.u32 2, %s29
        %v348 = vld [vmem:[%s288] sm:$0xf]
        %v349 = vld [vmem:[%s288 + $0x4] sm:$0xf]
        %v350 = vld [vmem:[%s288 + $0x8] sm:$0xf]
        %v351 = vld [vmem:[%s288 + $0xc] sm:$0xf]
        %v352 = vld [vmem:[%s288 + $0x10] sm:$0xf]
        %v353 = vld [vmem:[%s288 + $0x14] sm:$0xf]
        %v354 = vld [vmem:[%s288 + $0x18] sm:$0xf]
        %v355 = vld [vmem:[%s288 + $0x1c] sm:$0xf]
        %v356 = vld [vmem:[%s288 + $0x20] sm:$0xf]
        %v357 = vld [vmem:[%s288 + $0x24] sm:$0xf]
        %v358 = vld [vmem:[%s288 + $0x28] sm:$0xf]
        %v359 = vld [vmem:[%s288 + $0x2c] sm:$0xf]
        %v360 = vld [vmem:[%s288 + $0x30] sm:$0xf]
        %v361 = vld [vmem:[%s288 + $0x34] sm:$0xf]
        %v362 = vld [vmem:[%s288 + $0x38] sm:$0xf]
        %v363 = vld [vmem:[%s288 + $0x3c] sm:$0xf]
        %v364 = vld [vmem:[%s298] sm:$0x3]
        %v365 = vld [vmem:[%s298 + $0x2] sm:$0x3]
        %v366 = vld [vmem:[%s298 + $0x4] sm:$0x3]
        %v367 = vld [vmem:[%s298 + $0x6] sm:$0x3]
        %vm368 = vnez %v364
        %vm369 = vnez %v365
        %vm370 = vnez %v366
        %vm371 = vnez %v367
        %v372 = vld [vmem:[#allocation7] sm:$0xf]
        %v373 = vld [vmem:[#allocation7 + $0x4] sm:$0xf]
        %v374 = vld [vmem:[#allocation7 + $0x8] sm:$0xf]
        %v375 = vld [vmem:[#allocation7 + $0xc] sm:$0xf]
        %v376 = vld [vmem:[#allocation7 + $0x10] sm:$0xf]
        %v377 = vld [vmem:[#allocation7 + $0x14] sm:$0xf]
        %v378 = vld [vmem:[#allocation7 + $0x18] sm:$0xf]
        %v379 = vld [vmem:[#allocation7 + $0x1c] sm:$0xf]
        %v380 = vld [vmem:[#allocation7 + $0x20] sm:$0xf]
        %v381 = vld [vmem:[#allocation7 + $0x24] sm:$0xf]
        %v382 = vld [vmem:[#allocation7 + $0x28] sm:$0xf]
        %v383 = vld [vmem:[#allocation7 + $0x2c] sm:$0xf]
        %v384 = vld [vmem:[#allocation7 + $0x30] sm:$0xf]
        %v385 = vld [vmem:[#allocation7 + $0x34] sm:$0xf]
        %v386 = vld [vmem:[#allocation7 + $0x38] sm:$0xf]
        %v387 = vld [vmem:[#allocation7 + $0x3c] sm:$0xf]
        %v390 = vunpack.c.l.b16 %v348
        %v391 = vunpack.c.l.b16 %v349
        %v392 = vpack.c.b16 %v391, %v390
        %vm393 = vcmask 261120
        %v395 = vsel %vm393, %v392, 0
        %397 = vmatpush.bf16.xpose.msra.mxu0 0
        %398 = vmatpush.bf16.xpose.msra.mxu0 0
        %399 = vmatpush.bf16.xpose.msra.mxu0 0
        %400 = vmatpush.bf16.xpose.msra.mxu0 0
        %401 = vmatpush.bf16.xpose.msra.mxu0 0
        %402 = vmatpush.bf16.xpose.msra.mxu0 0
        %403 = vmatpush.bf16.xpose.msra.mxu0 0
        %404 = vmatpush.bf16.xpose.msra.mxu0 %v395
        %405 = vmatmul.bf16.gmra.mxu0 %v395
        %v406 = vpop.f32.mrf.mxu0
        %v407 = vadd.f32 0.0, %v406
        %v408 = vpop.f32.mrf.mxu0
        %v409 = vadd.f32 0.0, %v408
        %410 = vdwg.mxu0
        %v413 = vunpack.c.l.b16 %v350
        %v414 = vunpack.c.l.b16 %v351
        %v415 = vpack.c.b16 %v414, %v413
        %v417 = vsel %vm393, %v415, 0
        %419 = vmatpush.bf16.xpose.msra.mxu0 0
        %420 = vmatpush.bf16.xpose.msra.mxu0 0
        %421 = vmatpush.bf16.xpose.msra.mxu0 0
        %422 = vmatpush.bf16.xpose.msra.mxu0 0
        %423 = vmatpush.bf16.xpose.msra.mxu0 0
        %424 = vmatpush.bf16.xpose.msra.mxu0 0
        %425 = vmatpush.bf16.xpose.msra.mxu0 0
        %426 = vmatpush.bf16.xpose.msra.mxu0 %v417
        %427 = vmatmul.bf16.gmra.mxu0 %v417
        %v428 = vpop.f32.mrf.mxu0
        %v429 = vadd.f32 0.0, %v428
        %v430 = vpop.f32.mrf.mxu0
        %v431 = vadd.f32 0.0, %v430
        %432 = vdwg.mxu0
        %v435 = vunpack.c.l.b16 %v352
        %v436 = vunpack.c.l.b16 %v353
        %v437 = vpack.c.b16 %v436, %v435
        %v439 = vsel %vm393, %v437, 0
        %441 = vmatpush.bf16.xpose.msra.mxu0 0
        %442 = vmatpush.bf16.xpose.msra.mxu0 0
        %443 = vmatpush.bf16.xpose.msra.mxu0 0
        %444 = vmatpush.bf16.xpose.msra.mxu0 0
        %445 = vmatpush.bf16.xpose.msra.mxu0 0
        %446 = vmatpush.bf16.xpose.msra.mxu0 0
        %447 = vmatpush.bf16.xpose.msra.mxu0 0
        %448 = vmatpush.bf16.xpose.msra.mxu0 %v439
        %449 = vmatmul.bf16.gmra.mxu0 %v439
        %v450 = vpop.f32.mrf.mxu0
        %v451 = vadd.f32 0.0, %v450
        %v452 = vpop.f32.mrf.mxu0
        %v453 = vadd.f32 0.0, %v452
        %454 = vdwg.mxu0
        %v457 = vunpack.c.l.b16 %v354
        %v458 = vunpack.c.l.b16 %v355
        %v459 = vpack.c.b16 %v458, %v457
        %v461 = vsel %vm393, %v459, 0
        %463 = vmatpush.bf16.xpose.msra.mxu0 0
        %464 = vmatpush.bf16.xpose.msra.mxu0 0
        %465 = vmatpush.bf16.xpose.msra.mxu0 0
        %466 = vmatpush.bf16.xpose.msra.mxu0 0
        %467 = vmatpush.bf16.xpose.msra.mxu0 0
        %468 = vmatpush.bf16.xpose.msra.mxu0 0
        %469 = vmatpush.bf16.xpose.msra.mxu0 0
        %470 = vmatpush.bf16.xpose.msra.mxu0 %v461
        %471 = vmatmul.bf16.gmra.mxu0 %v461
        %v472 = vpop.f32.mrf.mxu0
        %v473 = vadd.f32 0.0, %v472
        %v474 = vpop.f32.mrf.mxu0
        %v475 = vadd.f32 0.0, %v474
        %476 = vdwg.mxu0
        %v479 = vunpack.c.l.b16 %v356
        %v480 = vunpack.c.l.b16 %v357
        %v481 = vpack.c.b16 %v480, %v479
        %v483 = vsel %vm393, %v481, 0
        %485 = vmatpush.bf16.xpose.msra.mxu0 0
        %486 = vmatpush.bf16.xpose.msra.mxu0 0
        %487 = vmatpush.bf16.xpose.msra.mxu0 0
        %488 = vmatpush.bf16.xpose.msra.mxu0 0
        %489 = vmatpush.bf16.xpose.msra.mxu0 0
        %490 = vmatpush.bf16.xpose.msra.mxu0 0
        %491 = vmatpush.bf16.xpose.msra.mxu0 0
        %492 = vmatpush.bf16.xpose.msra.mxu0 %v483
        %493 = vmatmul.bf16.gmra.mxu0 %v483
        %v494 = vpop.f32.mrf.mxu0
        %v495 = vadd.f32 0.0, %v494
        %v496 = vpop.f32.mrf.mxu0
        %v497 = vadd.f32 0.0, %v496
        %498 = vdwg.mxu0
        %v501 = vunpack.c.l.b16 %v358
        %v502 = vunpack.c.l.b16 %v359
        %v503 = vpack.c.b16 %v502, %v501
        %v505 = vsel %vm393, %v503, 0
        %507 = vmatpush.bf16.xpose.msra.mxu0 0
        %508 = vmatpush.bf16.xpose.msra.mxu0 0
        %509 = vmatpush.bf16.xpose.msra.mxu0 0
        %510 = vmatpush.bf16.xpose.msra.mxu0 0
        %511 = vmatpush.bf16.xpose.msra.mxu0 0
        %512 = vmatpush.bf16.xpose.msra.mxu0 0
        %513 = vmatpush.bf16.xpose.msra.mxu0 0
        %514 = vmatpush.bf16.xpose.msra.mxu0 %v505
        %515 = vmatmul.bf16.gmra.mxu0 %v505
        %v516 = vpop.f32.mrf.mxu0
        %v517 = vadd.f32 0.0, %v516
        %v518 = vpop.f32.mrf.mxu0
        %v519 = vadd.f32 0.0, %v518
        %520 = vdwg.mxu0
        %v523 = vunpack.c.l.b16 %v360
        %v524 = vunpack.c.l.b16 %v361
        %v525 = vpack.c.b16 %v524, %v523
        %v527 = vsel %vm393, %v525, 0
        %529 = vmatpush.bf16.xpose.msra.mxu0 0
        %530 = vmatpush.bf16.xpose.msra.mxu0 0
        %531 = vmatpush.bf16.xpose.msra.mxu0 0
        %532 = vmatpush.bf16.xpose.msra.mxu0 0
        %533 = vmatpush.bf16.xpose.msra.mxu0 0
        %534 = vmatpush.bf16.xpose.msra.mxu0 0
        %535 = vmatpush.bf16.xpose.msra.mxu0 0
        %536 = vmatpush.bf16.xpose.msra.mxu0 %v527
        %537 = vmatmul.bf16.gmra.mxu0 %v527
        %v538 = vpop.f32.mrf.mxu0
        %v539 = vadd.f32 0.0, %v538
        %v540 = vpop.f32.mrf.mxu0
        %v541 = vadd.f32 0.0, %v540
        %542 = vdwg.mxu0
        %v545 = vunpack.c.l.b16 %v362
        %v546 = vunpack.c.l.b16 %v363
        %v547 = vpack.c.b16 %v546, %v545
        %v549 = vsel %vm393, %v547, 0
        %551 = vmatpush.bf16.xpose.msra.mxu0 0
        %552 = vmatpush.bf16.xpose.msra.mxu0 0
        %553 = vmatpush.bf16.xpose.msra.mxu0 0
        %554 = vmatpush.bf16.xpose.msra.mxu0 0
        %555 = vmatpush.bf16.xpose.msra.mxu0 0
        %556 = vmatpush.bf16.xpose.msra.mxu0 0
        %557 = vmatpush.bf16.xpose.msra.mxu0 0
        %558 = vmatpush.bf16.xpose.msra.mxu0 %v549
        %559 = vmatmul.bf16.gmra.mxu0 %v549
        %v560 = vpop.f32.mrf.mxu0
        %v561 = vadd.f32 0.0, %v560
        %v562 = vpop.f32.mrf.mxu0
        %v563 = vadd.f32 0.0, %v562
        %564 = vdwg.mxu0
        %v565 = vmul.f32 %v407, 0.17677669
        %v566 = vmul.f32 %v409, 0.17677669
        %v567 = vmul.f32 %v429, 0.17677669
        %v568 = vmul.f32 %v431, 0.17677669
        %v569 = vmul.f32 %v451, 0.17677669
        %v570 = vmul.f32 %v453, 0.17677669
        %v571 = vmul.f32 %v473, 0.17677669
        %v572 = vmul.f32 %v475, 0.17677669
        %v573 = vmul.f32 %v495, 0.17677669
        %v574 = vmul.f32 %v497, 0.17677669
        %v575 = vmul.f32 %v517, 0.17677669
        %v576 = vmul.f32 %v519, 0.17677669
        %v577 = vmul.f32 %v539, 0.17677669
        %v578 = vmul.f32 %v541, 0.17677669
        %v579 = vmul.f32 %v561, 0.17677669
        %v580 = vmul.f32 %v563, 0.17677669
        %v581 = vsel %vm368, 16843009, 0
        %v582 = vsel %vm369, 16843009, 0
        %v583 = vsel %vm370, 16843009, 0
        %v584 = vsel %vm371, 16843009, 0
        %v585 = vunpack.c.0.s8 %v581
        %v586 = vunpack.c.0.s8 %v582
        %v587 = vunpack.c.0.s8 %v583
        %v588 = vunpack.c.0.s8 %v584
        %vm589 = vcmp.ne.s32.totalorder %v585, 0
        %vm590 = vcmp.ne.s32.totalorder %v586, 0
        %vm591 = vcmp.ne.s32.totalorder %v587, 0
        %vm592 = vcmp.ne.s32.totalorder %v588, 0
        %v593 = vsel %vm589, 1, 0
        %v594 = vsel %vm590, 1, 0
        %v595 = vsel %vm591, 1, 0
        %v596 = vsel %vm592, 1, 0
        %vm597 = vcmp.eq.s32.totalorder %v593, 1
        %vm598 = vcmp.eq.s32.totalorder %v594, 1
        %vm599 = vcmp.eq.s32.totalorder %v595, 1
        %vm600 = vcmp.eq.s32.totalorder %v596, 1
        %v601 = vsel %vm597, -1e+09, %v565
        %v602 = vsel %vm598, -1e+09, %v566
        %v603 = vsel %vm599, -1e+09, %v567
        %v604 = vsel %vm600, -1e+09, %v568
        %v605 = vsel %vm597, -1e+09, %v569
        %v606 = vsel %vm598, -1e+09, %v570
        %v607 = vsel %vm599, -1e+09, %v571
        %v608 = vsel %vm600, -1e+09, %v572
        %v609 = vsel %vm597, -1e+09, %v573
        %v610 = vsel %vm598, -1e+09, %v574
        %v611 = vsel %vm599, -1e+09, %v575
        %v612 = vsel %vm600, -1e+09, %v576
        %v613 = vsel %vm597, -1e+09, %v577
        %v614 = vsel %vm598, -1e+09, %v578
        %v615 = vsel %vm599, -1e+09, %v579
        %v616 = vsel %vm600, -1e+09, %v580
        %vm617 = vcmask 130048
        %v618 = vsel %vm617, %v601, -inf
        %619 = vmax.xlane.f32.xlu0 %v618
        %v620 = vpop.xlane.xlu0 %619
        %v621 = vsel %vm617, %v602, -inf
        %622 = vmax.xlane.f32.xlu0 %v621
        %v623 = vpop.xlane.xlu0 %622
        %v624 = vsel %vm617, %v603, -inf
        %625 = vmax.xlane.f32.xlu0 %v624
        %v626 = vpop.xlane.xlu0 %625
        %v627 = vsel %vm617, %v604, -inf
        %628 = vmax.xlane.f32.xlu0 %v627
        %v629 = vpop.xlane.xlu0 %628
        %v630 = vsel %vm617, %v605, -inf
        %631 = vmax.xlane.f32.xlu0 %v630
        %v632 = vpop.xlane.xlu0 %631
        %v633 = vsel %vm617, %v606, -inf
        %634 = vmax.xlane.f32.xlu0 %v633
        %v635 = vpop.xlane.xlu0 %634
        %v636 = vsel %vm617, %v607, -inf
        %637 = vmax.xlane.f32.xlu0 %v636
        %v638 = vpop.xlane.xlu0 %637
        %v639 = vsel %vm617, %v608, -inf
        %640 = vmax.xlane.f32.xlu0 %v639
        %v641 = vpop.xlane.xlu0 %640
        %v642 = vsel %vm617, %v609, -inf
        %643 = vmax.xlane.f32.xlu0 %v642
        %v644 = vpop.xlane.xlu0 %643
        %v645 = vsel %vm617, %v610, -inf
        %646 = vmax.xlane.f32.xlu0 %v645
        %v647 = vpop.xlane.xlu0 %646
        %v648 = vsel %vm617, %v611, -inf
        %649 = vmax.xlane.f32.xlu0 %v648
        %v650 = vpop.xlane.xlu0 %649
        %v651 = vsel %vm617, %v612, -inf
        %652 = vmax.xlane.f32.xlu0 %v651
        %v653 = vpop.xlane.xlu0 %652
        %v654 = vsel %vm617, %v613, -inf
        %655 = vmax.xlane.f32.xlu0 %v654
        %v656 = vpop.xlane.xlu0 %655
        %v657 = vsel %vm617, %v614, -inf
        %658 = vmax.xlane.f32.xlu0 %v657
        %v659 = vpop.xlane.xlu0 %658
        %v660 = vsel %vm617, %v615, -inf
        %661 = vmax.xlane.f32.xlu0 %v660
        %v662 = vpop.xlane.xlu0 %661
        %v663 = vsel %vm617, %v616, -inf
        %664 = vmax.xlane.f32.xlu0 %v663
        %v665 = vpop.xlane.xlu0 %664
        %v666 = vsub.f32 %v601, %v620
        %v667 = vsub.f32 %v602, %v623
        %v668 = vsub.f32 %v603, %v626
        %v669 = vsub.f32 %v604, %v629
        %v670 = vsub.f32 %v605, %v632
        %v671 = vsub.f32 %v606, %v635
        %v672 = vsub.f32 %v607, %v638
        %v673 = vsub.f32 %v608, %v641
        %v674 = vsub.f32 %v609, %v644
        %v675 = vsub.f32 %v610, %v647
        %v676 = vsub.f32 %v611, %v650
        %v677 = vsub.f32 %v612, %v653
        %v678 = vsub.f32 %v613, %v656
        %v679 = vsub.f32 %v614, %v659
        %v680 = vsub.f32 %v615, %v662
        %v681 = vsub.f32 %v616, %v665
        %v682 = vmul.f32 %v666, 1.442695
        %v683 = vpow.pop %v682
        %v684 = vmul.f32 %v667, 1.442695
        %v685 = vpow.pop %v684
        %v686 = vmul.f32 %v668, 1.442695
        %v687 = vpow.pop %v686
        %v688 = vmul.f32 %v669, 1.442695
        %v689 = vpow.pop %v688
        %v690 = vmul.f32 %v670, 1.442695
        %v691 = vpow.pop %v690
        %v692 = vmul.f32 %v671, 1.442695
        %v693 = vpow.pop %v692
        %v694 = vmul.f32 %v672, 1.442695
        %v695 = vpow.pop %v694
        %v696 = vmul.f32 %v673, 1.442695
        %v697 = vpow.pop %v696
        %v698 = vmul.f32 %v674, 1.442695
        %v699 = vpow.pop %v698
        %v700 = vmul.f32 %v675, 1.442695
        %v701 = vpow.pop %v700
        %v702 = vmul.f32 %v676, 1.442695
        %v703 = vpow.pop %v702
        %v704 = vmul.f32 %v677, 1.442695
        %v705 = vpow.pop %v704
        %v706 = vmul.f32 %v678, 1.442695
        %v707 = vpow.pop %v706
        %v708 = vmul.f32 %v679, 1.442695
        %v709 = vpow.pop %v708
        %v710 = vmul.f32 %v680, 1.442695
        %v711 = vpow.pop %v710
        %v712 = vmul.f32 %v681, 1.442695
        %v713 = vpow.pop %v712
        %v714 = vsel %vm617, %v683, 0.0
        %715 = vadd.xlane.f32.xlu0 %v714
        %v716 = vpop.xlane.xlu0 %715
        %v717 = vsel %vm617, %v685, 0.0
        %718 = vadd.xlane.f32.xlu0 %v717
        %v719 = vpop.xlane.xlu0 %718
        %v720 = vsel %vm617, %v687, 0.0
        %721 = vadd.xlane.f32.xlu0 %v720
        %v722 = vpop.xlane.xlu0 %721
        %v723 = vsel %vm617, %v689, 0.0
        %724 = vadd.xlane.f32.xlu0 %v723
        %v725 = vpop.xlane.xlu0 %724
        %v726 = vsel %vm617, %v691, 0.0
        %727 = vadd.xlane.f32.xlu0 %v726
        %v728 = vpop.xlane.xlu0 %727
        %v729 = vsel %vm617, %v693, 0.0
        %730 = vadd.xlane.f32.xlu0 %v729
        %v731 = vpop.xlane.xlu0 %730
        %v732 = vsel %vm617, %v695, 0.0
        %733 = vadd.xlane.f32.xlu0 %v732
        %v734 = vpop.xlane.xlu0 %733
        %v735 = vsel %vm617, %v697, 0.0
        %736 = vadd.xlane.f32.xlu0 %v735
        %v737 = vpop.xlane.xlu0 %736
        %v738 = vsel %vm617, %v699, 0.0
        %739 = vadd.xlane.f32.xlu0 %v738
        %v740 = vpop.xlane.xlu0 %739
        %v741 = vsel %vm617, %v701, 0.0
        %742 = vadd.xlane.f32.xlu0 %v741
        %v743 = vpop.xlane.xlu0 %742
        %v744 = vsel %vm617, %v703, 0.0
        %745 = vadd.xlane.f32.xlu0 %v744
        %v746 = vpop.xlane.xlu0 %745
        %v747 = vsel %vm617, %v705, 0.0
        %748 = vadd.xlane.f32.xlu0 %v747
        %v749 = vpop.xlane.xlu0 %748
        %v750 = vsel %vm617, %v707, 0.0
        %751 = vadd.xlane.f32.xlu0 %v750
        %v752 = vpop.xlane.xlu0 %751
        %v753 = vsel %vm617, %v709, 0.0
        %754 = vadd.xlane.f32.xlu0 %v753
        %v755 = vpop.xlane.xlu0 %754
        %v756 = vsel %vm617, %v711, 0.0
        %757 = vadd.xlane.f32.xlu0 %v756
        %v758 = vpop.xlane.xlu0 %757
        %v759 = vsel %vm617, %v713, 0.0
        %760 = vadd.xlane.f32.xlu0 %v759
        %v761 = vpop.xlane.xlu0 %760
        %v762 = vrcp.pop %v716
        %v763 = vrcp.pop %v719
        %v764 = vrcp.pop %v722
        %v765 = vrcp.pop %v725
        %v766 = vrcp.pop %v728
        %v767 = vrcp.pop %v731
        %v768 = vrcp.pop %v734
        %v769 = vrcp.pop %v737
        %v770 = vrcp.pop %v740
        %v771 = vrcp.pop %v743
        %v772 = vrcp.pop %v746
        %v773 = vrcp.pop %v749
        %v774 = vrcp.pop %v752
        %v775 = vrcp.pop %v755
        %v776 = vrcp.pop %v758
        %v777 = vrcp.pop %v761
        %v778 = vmul.f32 %v683, %v762
        %v779 = vmul.f32 %v685, %v763
        %v780 = vmul.f32 %v687, %v764
        %v781 = vmul.f32 %v689, %v765
        %v782 = vmul.f32 %v691, %v766
        %v783 = vmul.f32 %v693, %v767
        %v784 = vmul.f32 %v695, %v768
        %v785 = vmul.f32 %v697, %v769
        %v786 = vmul.f32 %v699, %v770
        %v787 = vmul.f32 %v701, %v771
        %v788 = vmul.f32 %v703, %v772
        %v789 = vmul.f32 %v705, %v773
        %v790 = vmul.f32 %v707, %v774
        %v791 = vmul.f32 %v709, %v775
        %v792 = vmul.f32 %v711, %v776
        %v793 = vmul.f32 %v713, %v777
        %v794 = vpack.c.bf16 %v778, %v778
        %v795 = vpack.c.bf16 %v779, %v779
        %v796 = vpack.c.bf16 %v780, %v780
        %v797 = vpack.c.bf16 %v781, %v781
        %v798 = vpack.c.bf16 %v782, %v782
        %v799 = vpack.c.bf16 %v783, %v783
        %v800 = vpack.c.bf16 %v784, %v784
        %v801 = vpack.c.bf16 %v785, %v785
        %v802 = vpack.c.bf16 %v786, %v786
        %v803 = vpack.c.bf16 %v787, %v787
        %v804 = vpack.c.bf16 %v788, %v788
        %v805 = vpack.c.bf16 %v789, %v789
        %v806 = vpack.c.bf16 %v790, %v790
        %v807 = vpack.c.bf16 %v791, %v791
        %v808 = vpack.c.bf16 %v792, %v792
        %v809 = vpack.c.bf16 %v793, %v793
        %vm810 = vcmask 125952
        %811 = vst.msk [vmem:[%s340] sm:$0xf] %vm810, %v794
        %812 = vst.msk [vmem:[%s340 + $0x4] sm:$0xf] %vm810, %v795
        %813 = vst.msk [vmem:[%s340 + $0x8] sm:$0xf] %vm810, %v796
        %814 = vst.msk [vmem:[%s340 + $0xc] sm:$0xf] %vm810, %v797
        %815 = vst.msk [vmem:[%s340 + $0x10] sm:$0xf] %vm810, %v798
        %816 = vst.msk [vmem:[%s340 + $0x14] sm:$0xf] %vm810, %v799
        %817 = vst.msk [vmem:[%s340 + $0x18] sm:$0xf] %vm810, %v800
        %818 = vst.msk [vmem:[%s340 + $0x1c] sm:$0xf] %vm810, %v801
        %819 = vst.msk [vmem:[%s340 + $0x20] sm:$0xf] %vm810, %v802
        %820 = vst.msk [vmem:[%s340 + $0x24] sm:$0xf] %vm810, %v803
        %821 = vst.msk [vmem:[%s340 + $0x28] sm:$0xf] %vm810, %v804
        %822 = vst.msk [vmem:[%s340 + $0x2c] sm:$0xf] %vm810, %v805
        %823 = vst.msk [vmem:[%s340 + $0x30] sm:$0xf] %vm810, %v806
        %824 = vst.msk [vmem:[%s340 + $0x34] sm:$0xf] %vm810, %v807
        %825 = vst.msk [vmem:[%s340 + $0x38] sm:$0xf] %vm810, %v808
        %826 = vst.msk [vmem:[%s340 + $0x3c] sm:$0xf] %vm810, %v809
        %v829 = vunpack.c.l.b16 %v794
        %v830 = vunpack.c.l.b16 %v795
        %v831 = vpack.c.b16 %v830, %v829
        %v834 = vsel %vm617, %v831, 0
        %836 = vmatpush.bf16.msra.mxu0 0
        %837 = vmatpush.bf16.msra.mxu0 0
        %838 = vmatpush.bf16.msra.mxu0 0
        %839 = vmatpush.bf16.msra.mxu0 0
        %840 = vmatpush.bf16.msra.mxu0 0
        %841 = vmatpush.bf16.msra.mxu0 0
        %842 = vmatpush.bf16.msra.mxu0 0
        %843 = vmatpush.bf16.msra.mxu0 %v392
        %844 = vmatmul.bf16.gmra.mxu0 %v834
        %v845 = vpop.f32.mrf.mxu0
        %v846 = vadd.f32 0.0, %v845
        %v847 = vpop.f32.mrf.mxu0
        %v848 = vadd.f32 0.0, %v847
        %849 = vdwg.mxu0
        %v852 = vunpack.c.l.b16 %v796
        %v853 = vunpack.c.l.b16 %v797
        %v854 = vpack.c.b16 %v853, %v852
        %v857 = vsel %vm617, %v854, 0
        %859 = vmatpush.bf16.msra.mxu0 0
        %860 = vmatpush.bf16.msra.mxu0 0
        %861 = vmatpush.bf16.msra.mxu0 0
        %862 = vmatpush.bf16.msra.mxu0 0
        %863 = vmatpush.bf16.msra.mxu0 0
        %864 = vmatpush.bf16.msra.mxu0 0
        %865 = vmatpush.bf16.msra.mxu0 0
        %866 = vmatpush.bf16.msra.mxu0 %v415
        %867 = vmatmul.bf16.gmra.mxu0 %v857
        %v868 = vpop.f32.mrf.mxu0
        %v869 = vadd.f32 0.0, %v868
        %v870 = vpop.f32.mrf.mxu0
        %v871 = vadd.f32 0.0, %v870
        %872 = vdwg.mxu0
        %v875 = vunpack.c.l.b16 %v798
        %v876 = vunpack.c.l.b16 %v799
        %v877 = vpack.c.b16 %v876, %v875
        %v880 = vsel %vm617, %v877, 0
        %882 = vmatpush.bf16.msra.mxu0 0
        %883 = vmatpush.bf16.msra.mxu0 0
        %884 = vmatpush.bf16.msra.mxu0 0
        %885 = vmatpush.bf16.msra.mxu0 0
        %886 = vmatpush.bf16.msra.mxu0 0
        %887 = vmatpush.bf16.msra.mxu0 0
        %888 = vmatpush.bf16.msra.mxu0 0
        %889 = vmatpush.bf16.msra.mxu0 %v437
        %890 = vmatmul.bf16.gmra.mxu0 %v880
        %v891 = vpop.f32.mrf.mxu0
        %v892 = vadd.f32 0.0, %v891
        %v893 = vpop.f32.mrf.mxu0
        %v894 = vadd.f32 0.0, %v893
        %895 = vdwg.mxu0
        %v898 = vunpack.c.l.b16 %v800
        %v899 = vunpack.c.l.b16 %v801
        %v900 = vpack.c.b16 %v899, %v898
        %v903 = vsel %vm617, %v900, 0
        %905 = vmatpush.bf16.msra.mxu0 0
        %906 = vmatpush.bf16.msra.mxu0 0
        %907 = vmatpush.bf16.msra.mxu0 0
        %908 = vmatpush.bf16.msra.mxu0 0
        %909 = vmatpush.bf16.msra.mxu0 0
        %910 = vmatpush.bf16.msra.mxu0 0
        %911 = vmatpush.bf16.msra.mxu0 0
        %912 = vmatpush.bf16.msra.mxu0 %v459
        %913 = vmatmul.bf16.gmra.mxu0 %v903
        %v914 = vpop.f32.mrf.mxu0
        %v915 = vadd.f32 0.0, %v914
        %v916 = vpop.f32.mrf.mxu0
        %v917 = vadd.f32 0.0, %v916
        %918 = vdwg.mxu0
        %v921 = vunpack.c.l.b16 %v802
        %v922 = vunpack.c.l.b16 %v803
        %v923 = vpack.c.b16 %v922, %v921
        %v926 = vsel %vm617, %v923, 0
        %928 = vmatpush.bf16.msra.mxu0 0
        %929 = vmatpush.bf16.msra.mxu0 0
        %930 = vmatpush.bf16.msra.mxu0 0
        %931 = vmatpush.bf16.msra.mxu0 0
        %932 = vmatpush.bf16.msra.mxu0 0
        %933 = vmatpush.bf16.msra.mxu0 0
        %934 = vmatpush.bf16.msra.mxu0 0
        %935 = vmatpush.bf16.msra.mxu0 %v481
        %936 = vmatmul.bf16.gmra.mxu0 %v926
        %v937 = vpop.f32.mrf.mxu0
        %v938 = vadd.f32 0.0, %v937
        %v939 = vpop.f32.mrf.mxu0
        %v940 = vadd.f32 0.0, %v939
        %941 = vdwg.mxu0
        %v944 = vunpack.c.l.b16 %v804
        %v945 = vunpack.c.l.b16 %v805
        %v946 = vpack.c.b16 %v945, %v944
        %v949 = vsel %vm617, %v946, 0
        %951 = vmatpush.bf16.msra.mxu0 0
        %952 = vmatpush.bf16.msra.mxu0 0
        %953 = vmatpush.bf16.msra.mxu0 0
        %954 = vmatpush.bf16.msra.mxu0 0
        %955 = vmatpush.bf16.msra.mxu0 0
        %956 = vmatpush.bf16.msra.mxu0 0
        %957 = vmatpush.bf16.msra.mxu0 0
        %958 = vmatpush.bf16.msra.mxu0 %v503
        %959 = vmatmul.bf16.gmra.mxu0 %v949
        %v960 = vpop.f32.mrf.mxu0
        %v961 = vadd.f32 0.0, %v960
        %v962 = vpop.f32.mrf.mxu0
        %v963 = vadd.f32 0.0, %v962
        %964 = vdwg.mxu0
        %v967 = vunpack.c.l.b16 %v806
        %v968 = vunpack.c.l.b16 %v807
        %v969 = vpack.c.b16 %v968, %v967
        %v972 = vsel %vm617, %v969, 0
        %974 = vmatpush.bf16.msra.mxu0 0
        %975 = vmatpush.bf16.msra.mxu0 0
        %976 = vmatpush.bf16.msra.mxu0 0
        %977 = vmatpush.bf16.msra.mxu0 0
        %978 = vmatpush.bf16.msra.mxu0 0
        %979 = vmatpush.bf16.msra.mxu0 0
        %980 = vmatpush.bf16.msra.mxu0 0
        %981 = vmatpush.bf16.msra.mxu0 %v525
        %982 = vmatmul.bf16.gmra.mxu0 %v972
        %v983 = vpop.f32.mrf.mxu0
        %v984 = vadd.f32 0.0, %v983
        %v985 = vpop.f32.mrf.mxu0
        %v986 = vadd.f32 0.0, %v985
        %987 = vdwg.mxu0
        %v990 = vunpack.c.l.b16 %v808
        %v991 = vunpack.c.l.b16 %v809
        %v992 = vpack.c.b16 %v991, %v990
        %v995 = vsel %vm617, %v992, 0
        %997 = vmatpush.bf16.msra.mxu0 0
        %998 = vmatpush.bf16.msra.mxu0 0
        %999 = vmatpush.bf16.msra.mxu0 0
        %1000 = vmatpush.bf16.msra.mxu0 0
        %1001 = vmatpush.bf16.msra.mxu0 0
        %1002 = vmatpush.bf16.msra.mxu0 0
        %1003 = vmatpush.bf16.msra.mxu0 0
        %1004 = vmatpush.bf16.msra.mxu0 %v547
        %1005 = vmatmul.bf16.gmra.mxu0 %v995
        %v1006 = vpop.f32.mrf.mxu0
        %v1007 = vadd.f32 0.0, %v1006
        %v1008 = vpop.f32.mrf.mxu0
        %v1009 = vadd.f32 0.0, %v1008
        %1010 = vdwg.mxu0
        %v1011 = vpack.c.bf16 %v848, %v846
        %v1012 = vpack.c.bf16 %v871, %v869
        %v1013 = vpack.c.bf16 %v894, %v892
        %v1014 = vpack.c.bf16 %v917, %v915
        %v1019 = vunpack.c.l.b16 %v376
        %v1020 = vunpack.c.l.b16 %v377
        %v1021 = vunpack.c.l.b16 %v378
        %v1022 = vunpack.c.l.b16 %v379
        %v1023 = vpack.c.b16 %v1020, %v1019
        %v1024 = vpack.c.b16 %v1022, %v1021
        %v1028 = vsel %vm393, %v1013, 0
        %v1031 = vsel %vm393, %v1014, 0
        %1033 = vmatpush.bf16.msra.mxu0 0
        %1034 = vmatpush.bf16.msra.mxu0 0
        %1035 = vmatpush.bf16.msra.mxu0 0
        %1036 = vmatpush.bf16.msra.mxu0 0
        %1037 = vmatpush.bf16.msra.mxu0 0
        %1038 = vmatpush.bf16.msra.mxu0 0
        %1039 = vmatpush.bf16.msra.mxu0 %v1024
        %1040 = vmatpush.bf16.msra.mxu0 %v1023
        %1041 = vmatmul.bf16.gmra.mxu0 %v1028
        %v1042 = vpop.f32.mrf.mxu0
        %v1043 = vadd.f32 0.0, %v1042
        %v1044 = vpop.f32.mrf.mxu0
        %v1045 = vadd.f32 0.0, %v1044
        %1046 = vmatmul.bf16.gmra.mxu0 %v1031
        %v1047 = vpop.f32.mrf.mxu0
        %v1048 = vadd.f32 0.0, %v1047
        %v1049 = vpop.f32.mrf.mxu0
        %v1050 = vadd.f32 0.0, %v1049
        %1051 = vdwg.mxu0
        %v1056 = vunpack.c.l.b16 %v372
        %v1057 = vunpack.c.l.b16 %v373
        %v1058 = vunpack.c.l.b16 %v374
        %v1059 = vunpack.c.l.b16 %v375
        %v1060 = vpack.c.b16 %v1057, %v1056
        %v1061 = vpack.c.b16 %v1059, %v1058
        %v1065 = vsel %vm393, %v1011, 0
        %v1068 = vsel %vm393, %v1012, 0
        %1070 = vmatpush.bf16.msra.mxu0 0
        %1071 = vmatpush.bf16.msra.mxu0 0
        %1072 = vmatpush.bf16.msra.mxu0 0
        %1073 = vmatpush.bf16.msra.mxu0 0
        %1074 = vmatpush.bf16.msra.mxu0 0
        %1075 = vmatpush.bf16.msra.mxu0 0
        %1076 = vmatpush.bf16.msra.mxu0 %v1061
        %1077 = vmatpush.bf16.msra.mxu0 %v1060
        %1078 = vmatmul.bf16.gmra.mxu0 %v1065
        %v1079 = vpop.f32.mrf.mxu0
        %v1080 = vadd.f32 %v1043, %v1079
        %v1081 = vpop.f32.mrf.mxu0
        %v1082 = vadd.f32 %v1045, %v1081
        %1083 = vmatmul.bf16.gmra.mxu0 %v1068
        %v1084 = vpop.f32.mrf.mxu0
        %v1085 = vadd.f32 %v1048, %v1084
        %v1086 = vpop.f32.mrf.mxu0
        %v1087 = vadd.f32 %v1050, %v1086
        %1088 = vdwg.mxu0
        %v1089 = vpack.c.bf16 %v940, %v938
        %v1090 = vpack.c.bf16 %v963, %v961
        %v1095 = vunpack.c.l.b16 %v380
        %v1096 = vunpack.c.l.b16 %v381
        %v1097 = vunpack.c.l.b16 %v382
        %v1098 = vunpack.c.l.b16 %v383
        %v1099 = vpack.c.b16 %v1096, %v1095
        %v1100 = vpack.c.b16 %v1098, %v1097
        %v1104 = vsel %vm393, %v1089, 0
        %v1107 = vsel %vm393, %v1090, 0
        %1109 = vmatpush.bf16.msra.mxu0 0
        %1110 = vmatpush.bf16.msra.mxu0 0
        %1111 = vmatpush.bf16.msra.mxu0 0
        %1112 = vmatpush.bf16.msra.mxu0 0
        %1113 = vmatpush.bf16.msra.mxu0 0
        %1114 = vmatpush.bf16.msra.mxu0 0
        %1115 = vmatpush.bf16.msra.mxu0 %v1100
        %1116 = vmatpush.bf16.msra.mxu0 %v1099
        %1117 = vmatmul.bf16.gmra.mxu0 %v1104
        %v1118 = vpop.f32.mrf.mxu0
        %v1119 = vadd.f32 0.0, %v1118
        %v1120 = vpop.f32.mrf.mxu0
        %v1121 = vadd.f32 0.0, %v1120
        %1122 = vmatmul.bf16.gmra.mxu0 %v1107
        %v1123 = vpop.f32.mrf.mxu0
        %v1124 = vadd.f32 0.0, %v1123
        %v1125 = vpop.f32.mrf.mxu0
        %v1126 = vadd.f32 0.0, %v1125
        %1127 = vdwg.mxu0
        %v1128 = vadd.f32 %v1080, %v1119
        %v1129 = vadd.f32 %v1082, %v1121
        %v1130 = vadd.f32 %v1085, %v1124
        %v1131 = vadd.f32 %v1087, %v1126
        %v1132 = vpack.c.bf16 %v986, %v984
        %v1133 = vpack.c.bf16 %v1009, %v1007
        %v1138 = vunpack.c.l.b16 %v384
        %v1139 = vunpack.c.l.b16 %v385
        %v1140 = vunpack.c.l.b16 %v386
        %v1141 = vunpack.c.l.b16 %v387
        %v1142 = vpack.c.b16 %v1139, %v1138
        %v1143 = vpack.c.b16 %v1141, %v1140
        %v1147 = vsel %vm393, %v1132, 0
        %v1150 = vsel %vm393, %v1133, 0
        %1152 = vmatpush.bf16.msra.mxu0 0
        %1153 = vmatpush.bf16.msra.mxu0 0
        %1154 = vmatpush.bf16.msra.mxu0 0
        %1155 = vmatpush.bf16.msra.mxu0 0
        %1156 = vmatpush.bf16.msra.mxu0 0
        %1157 = vmatpush.bf16.msra.mxu0 0
        %1158 = vmatpush.bf16.msra.mxu0 %v1143
        %1159 = vmatpush.bf16.msra.mxu0 %v1142
        %1160 = vmatmul.bf16.gmra.mxu0 %v1147
        %v1161 = vpop.f32.mrf.mxu0
        %v1162 = vadd.f32 0.0, %v1161
        %v1163 = vpop.f32.mrf.mxu0
        %v1164 = vadd.f32 0.0, %v1163
        %1165 = vmatmul.bf16.gmra.mxu0 %v1150
        %v1166 = vpop.f32.mrf.mxu0
        %v1167 = vadd.f32 0.0, %v1166
        %v1168 = vpop.f32.mrf.mxu0
        %v1169 = vadd.f32 0.0, %v1168
        %1170 = vdwg.mxu0
        %v1171 = vadd.f32 %v1128, %v1162
        %v1172 = vadd.f32 %v1129, %v1164
        %v1173 = vadd.f32 %v1130, %v1167
        %v1174 = vadd.f32 %v1131, %v1169
        %v1175 = vld [vmem:[%s3] sm:$0x1]
        %v1177 = vperm.slane %v1175, 0
        %v1179 = vadd.f32 %v1171, %v1177
        %v1180 = vadd.f32 %v1172, %v1177
        %v1181 = vadd.f32 %v1173, %v1177
        %v1182 = vadd.f32 %v1174, %v1177
        %v1183 = vpack.c.bf16 %v1179, %v1179
        %v1184 = vpack.c.bf16 %v1180, %v1180
        %v1185 = vpack.c.bf16 %v1181, %v1181
        %v1186 = vpack.c.bf16 %v1182, %v1182
        %1187 = vst [vmem:[%s333] sm:$0xf] %v1183
        %1188 = vst [vmem:[%s333 + $0x4] sm:$0xf] %v1184
        %1189 = vst [vmem:[%s333 + $0x8] sm:$0xf] %v1185
        %1190 = vst [vmem:[%s333 + $0xc] sm:$0xf] %v1186
        %s1191 = sand.u32 %s131, 1
        %s1192 = scalar_lea.sflag [#allocation4], %s1191
        %s1193 = sand.u32 %s131, 1
        %s1194 = smul.addr %s1193, 16
        %s1195 = scalar_lea.vmem [#allocation8], %s1194
        %s1196 = sand.u32 %s157, 1
        %s1197 = scalar_lea.sflag [#allocation10], %s1196
        %s1198 = sand.u32 %s157, 1
        %s1199 = smul.addr %s1198, 64
        %s1200 = scalar_lea.vmem [#allocation9], %s1199
        // Predicated region
        $region49: #{tpu_custom_call.1} parent=35 // pred_check
          %p1201 = pneg %p141
        $region50: #{tpu_custom_call.1} parent=35 // pred_check_branch
          %1203 = sbr.rel (%p1201) target = $region52
        $region51: #{tpu_custom_call.1} parent=35 // pred_region
          %s1204 = smul.u32 2, %s29
          %1206 = vsyncadd %s1192, 0
          %s1207 = smul.addr %s1204, 2
          %s1208 = smul.addr %s1207, 4
          %s1209 = scalar_lea.hbm %s4, %s1208
          %s1210 = sshll.u32 %s1195, 4
          %s1211 = int_to_ptr.vmem [resolvable:$true] %s1210
          %s1212 = sshll.u32 %s1209, 4
          %s1213 = int_to_ptr.hbm [resolvable:$true] %s1212
          %1218 = dma.vmem_to_hbm [thread:$0]  %s1211, 256, %s1213, %s1192, 64, 64, 4
        $region52: #{tpu_custom_call.1} parent=35 // pred_fallthru
          _
        // Predicated region
        $region53: #{tpu_custom_call.1} parent=35 // pred_check
          %p1219 = pneg %p167
        $region54: #{tpu_custom_call.1} parent=35 // pred_check_branch
          %1221 = sbr.rel (%p1219) target = $region56
        $region55: #{tpu_custom_call.1} parent=35 // pred_region
          #allocation14 [shape = 'u32[6]{0}', space=smem, size = 0x18, scoped, tag = 'DMA stride descriptor']
          %s1222 = smul.u32 2, %s29
          %1224 = vsyncadd %s1197, 0
          %s1225 = smul.addr %s1222, 2
          %s1226 = smul.addr %s1225, 4
          %s1227 = scalar_lea.hbm %s5, %s1226
          %s1229 = sshll.u32 1, 14
          %s1230 = sxor.u32 4294967295, %s1229
          %s1233 = sshll.u32 7, 18
          %s1234 = sxor.u32 4294967295, %s1233
          %s1235 = sand.u32 0, %s1234
          %s1237 = sor.u32 %s1235, 0
          %s1238 = sshll.u32 %s1200, 4
          %s1239 = int_to_ptr.vmem [resolvable:$true] %s1238
          %s1240 = sshll.u32 %s1227, 4
          %s1241 = int_to_ptr.hbm [resolvable:$true] %s1240
          %1247 = sst [smem:[#allocation14]] 256
          %s1248 = scalar_lea.smem [#allocation14], 1
          %1249 = sst [smem:[%s1248]] 512
          %s1250 = scalar_lea.smem [#allocation14], 2
          %1251 = sst [smem:[%s1250]] 4
          %s1252 = scalar_lea.smem [#allocation14], 3
          %1253 = sst [smem:[%s1252]] 64
          %s1254 = scalar_lea.smem [#allocation14], 4
          %1255 = sst [smem:[%s1254]] 64
          %s1256 = scalar_lea.smem [#allocation14], 5
          %1257 = sst [smem:[%s1256]] 4
          %1259 = dma.general %s1239, 1024, %s1241, %s1197, [#allocation13], [#allocation14], %s1237, 0
        $region56: #{tpu_custom_call.1} parent=35 // pred_fallthru
          _
      $region36: #{tpu_custom_call.1} parent=5 // pred_fallthru
        _
      %p1260 = scmp.le.s32.totalorder 2, %s24
      // Predicated region
      $region57: #{tpu_custom_call.1} parent=5 // pred_check
        %p1261 = pneg %p1260
      $region58: #{tpu_custom_call.1} parent=5 // pred_check_branch
        %1263 = sbr.rel (%p1261) target = $region60
      $region59: #{tpu_custom_call.1} parent=5 // pred_region
        %s1264 = ssub.s32 %s24, 2
        // Predicated region
        $region61: #{tpu_custom_call.1} parent=59 // pred_check
          %p1265 = pneg %p147
        $region62: #{tpu_custom_call.1} parent=59 // pred_check_branch
          %1267 = sbr.rel (%p1265) target = $region64
        $region63: #{tpu_custom_call.1} parent=59 // pred_region
          %s1268 = sand.u32 %s132, 1
          %s1269 = scalar_lea.sflag [#allocation4], %s1268
          %s1270 = sand.u32 %s132, 1
          %s1271 = smul.addr %s1270, 16
          %s1272 = scalar_lea.vmem [#allocation8], %s1271
          %1274 = dma.done %s1269, 256
        $region64: #{tpu_custom_call.1} parent=59 // pred_fallthru
          _
        // Predicated region
        $region65: #{tpu_custom_call.1} parent=59 // pred_check
          %p1275 = pneg %p173
        $region66: #{tpu_custom_call.1} parent=59 // pred_check_branch
          %1277 = sbr.rel (%p1275) target = $region68
        $region67: #{tpu_custom_call.1} parent=59 // pred_region
          %s1278 = sand.u32 %s158, 1
          %s1279 = scalar_lea.sflag [#allocation10], %s1278
          %s1280 = sand.u32 %s158, 1
          %s1281 = smul.addr %s1280, 64
          %s1282 = scalar_lea.vmem [#allocation9], %s1281
          %1284 = dma.done %s1279, 1024
        $region68: #{tpu_custom_call.1} parent=59 // pred_fallthru
          _
      $region60: #{tpu_custom_call.1} parent=5 // pred_fallthru
        _
    $region6: #{tpu_custom_call.1} parent=1 // loop_footer
      %s28 = sadd.s32 1, %s24
    $region7: #{tpu_custom_call.1} parent=1 // loop_footer_branch
      %23 = sbr.rel target = $region3
    $region8: #{tpu_custom_call.1} parent=1 // loop_exit
      _
    %1285 = vsyncpa [#allocation3], 1
    %s1286 = scalar_lea.sflag [#allocation3], 1
    %1287 = vsyncpa %s1286, 1
    %1288 = vsyncpa [#allocation6], 1
    %s1289 = scalar_lea.sflag [#allocation6], 1
    %1290 = vsyncpa %s1289, 1
    %1291 = vsyncpa [#allocation4], 1
    %s1292 = scalar_lea.sflag [#allocation4], 1
    %1293 = vsyncpa %s1292, 1
    %1294 = vsyncpa [#allocation10], 1
    %s1295 = scalar_lea.sflag [#allocation10], 1
    %1296 = vsyncpa %s1295, 1

// kernel: tpu_custom_call.1
$region0: #{tpu_custom_call.1}
  #allocation0 [shape = 'u32[]', space=smem, size = 0x4, offset = 0x4, fixed_abs, tag = 'smem constant byte address 0x4 - core index']
  #allocation1 [shape = 'u32[72,128]{1,0:T(1,128)}', space=vmem, size = 0x9000, scoped, tag = 'internal scratch']
  #allocation11 [shape = 's32[]', space=sflag, size = 0x4, offset = 0, fixed_abs, tag = 'sflag constant byte address 0x0 - dummy sync flag']
  #allocation13 [shape = 's32[]', space=sflag, size = 0x4, offset = 0, fixed_abs, tag = 'sflag constant byte address 0x0 - dummy sync flag']
  %s0 = inlined_call_operand.hbm [shape: bf16[4,4,16,32], index: 0, kind: input, shape index: {}]
  %s1 = inlined_call_operand.hbm [shape: s8[4,16,16], index: 1, kind: input, shape index: {}]
  %s2 = inlined_call_operand.hbm [shape: bf16[4,32,128], index: 2, kind: input, shape index: {}]
  %s3 = inlined_call_operand.vmem [shape: f32[1,128], index: 3, kind: input, shape index: {}]
  %s4 = inlined_call_operand.hbm [shape: bf16[4,16,128], index: 4, kind: output, shape index: {0}]
  %s5 = inlined_call_operand.hbm [shape: bf16[4,4,16,16], index: 5, kind: output, shape index: {1}]
  %6 = xla_tuple %s4, %s5
  %s7 = sld [smem:[#allocation0]]
  $region69: #{tpu_custom_call.1} parent=0
    _
  %s9 = ssub.s32 1, %s7
  %s10 = scalar_select 0, %s9, %s7
  $region1: #{tpu_custom_call.1} parent=0
    #allocation2 [shape = 'u8[65536]{0}', space=vmem, size = 0x10000, scoped, tag = 'input window, operand 0']
    #allocation3 [shape = 's32[2]{0}', space=sflag, size = 0x8, scoped, tag = 'scoped memory for tpu_custom_call.1']
    #allocation4 [shape = 's32[2]{0}', space=sflag, size = 0x8, scoped, tag = 'scoped memory for tpu_custom_call.1']
    #allocation5 [shape = 'u8[8192]{0}', space=vmem, size = 0x2000, scoped, tag = 'input window, operand 1']
    #allocation6 [shape = 's32[2]{0}', space=sflag, size = 0x8, scoped, tag = 'scoped memory for tpu_custom_call.1']
    #allocation7 [shape = 'u8[32768]{0}', space=vmem, size = 0x8000, scoped, tag = 'input window, operand 2, single buffered']
    #allocation8 [shape = 'u8[16384]{0}', space=vmem, size = 0x4000, scoped, tag = 'output window, operand 0']
    #allocation9 [shape = 'u8[65536]{0}', space=vmem, size = 0x10000, scoped, tag = 'output window, operand 1']
    #allocation10 [shape = 's32[2]{0}', space=sflag, size = 0x8, scoped, tag = 'scoped memory for tpu_custom_call.1']
    %11 = vsyncpa [#allocation3], 0
    %s12 = scalar_lea.sflag [#allocation3], 1
    %13 = vsyncpa %s12, 0
    %14 = vsyncpa [#allocation6], 0
    %s15 = scalar_lea.sflag [#allocation6], 1
    %16 = vsyncpa %s15, 0
    %17 = vsyncpa [#allocation4], 0
    %s18 = scalar_lea.sflag [#allocation4], 1
    %19 = vsyncpa %s18, 0
    %20 = vsyncpa [#allocation10], 0
    %s21 = scalar_lea.sflag [#allocation10], 1
    %22 = vsyncpa %s21, 0
    loop: start=0, step=1, limit=4
    $region2: #{tpu_custom_call.1} parent=1 // loop_pre_header
      _
    $region3: #{tpu_custom_call.1} parent=1 // loop_header
      %s24 = sphi 0, %s28
      %p25 = scmp.ge.s32.totalorder %s24, 4
      %s34 = sphi 0, %s36
      %s37 = sphi 0, %s34
      %s38 = sphi 0, %s37
      %s54 = sphi 0, %s38
      %s60 = sphi 0, %s62
      %s63 = sphi 0, %s60
      %s64 = sphi 0, %s63
      %s80 = sphi 0, %s64
      %s84 = sphi 0, %s84
      %s86 = sphi 0, %s84
      %s87 = sphi 0, %s86
      %s101 = sphi 0, %s87
      %s105 = sphi 0, %s105
      %s107 = sphi 0, %s105
      %s108 = sphi 0, %s107
      %s122 = sphi 0, %s108
      %s128 = sphi 0, %s130
      %s131 = sphi 0, %s128
      %s132 = sphi 0, %s131
      %s148 = sphi 0, %s132
      %s154 = sphi 0, %s156
      %s157 = sphi 0, %s154
      %s158 = sphi 0, %s157
      %s174 = sphi 0, %s158
    $region4: #{tpu_custom_call.1} parent=1 // loop_header_branch
      %27 = sbr.rel (%p25) target = $region8
    $region5: #{tpu_custom_call.1} parent=1 // loop_body
      %s29 = ssub.s32 %s24, 1
      %s30 = ssub.s32 %s24, 2
      %s31 = sadd.s32 %s24, 1
      %s32 = ssub.s32 %s24, %s31
      %p33 = scmp.eq.s32.totalorder %s32, 0
      %s35 = sadd.s32 %s34, 1
      %s36 = scalar_select %p33, %s34, %s35
      %p39 = pneg %p33
      %p40 = scmp.eq.s32.totalorder %s24, 1
      %p41 = por %p39, %p40
      %p42 = scmp.ne.s32.totalorder %s34, %s37
      %p43 = scmp.eq.s32.totalorder %s24, 0
      %p44 = por %p42, %p43
      %p45 = scmp.ne.s32.totalorder %s34, %s37
      %p46 = scmp.eq.s32.totalorder %s29, 1
      %p47 = por %p45, %p46
      %p48 = scmp.ne.s32.totalorder %s37, %s38
      %p49 = scmp.eq.s32.totalorder %s29, 0
      %p50 = por %p48, %p49
      %p51 = scmp.ne.s32.totalorder %s37, %s38
      %p52 = scmp.eq.s32.totalorder %s30, 1
      %p53 = por %p51, %p52
      %p55 = scmp.ne.s32.totalorder %s38, %s54
      %p56 = scmp.eq.s32.totalorder %s30, 0
      %p57 = por %p55, %p56
      %s58 = ssub.s32 %s24, %s31
      %p59 = scmp.eq.s32.totalorder %s58, 0
      %s61 = sadd.s32 %s60, 1
      %s62 = scalar_select %p59, %s60, %s61
      %p65 = pneg %p59
      %p66 = scmp.eq.s32.totalorder %s24, 1
      %p67 = por %p65, %p66
      %p68 = scmp.ne.s32.totalorder %s60, %s63
      %p69 = scmp.eq.s32.totalorder %s24, 0
      %p70 = por %p68, %p69
      %p71 = scmp.ne.s32.totalorder %s60, %s63
      %p72 = scmp.eq.s32.totalorder %s29, 1
      %p73 = por %p71, %p72
      %p74 = scmp.ne.s32.totalorder %s63, %s64
      %p75 = scmp.eq.s32.totalorder %s29, 0
      %p76 = por %p74, %p75
      %p77 = scmp.ne.s32.totalorder %s63, %s64
      %p78 = scmp.eq.s32.totalorder %s30, 1
      %p79 = por %p77, %p78
      %p81 = scmp.ne.s32.totalorder %s64, %s80
      %p82 = scmp.eq.s32.totalorder %s30, 0
      %p83 = por %p81, %p82
      %s85 = sadd.s32 %s84, 1
      %p88 = scmp.eq.s32.totalorder %s24, 1
      %p89 = scmp.ne.s32.totalorder %s84, %s86
      %p90 = scmp.eq.s32.totalorder %s24, 0
      %p91 = por %p89, %p90
      %p92 = scmp.ne.s32.totalorder %s84, %s86
      %p93 = scmp.eq.s32.totalorder %s29, 1
      %p94 = por %p92, %p93
      %p95 = scmp.ne.s32.totalorder %s86, %s87
      %p96 = scmp.eq.s32.totalorder %s29, 0
      %p97 = por %p95, %p96
      %p98 = scmp.ne.s32.totalorder %s86, %s87
      %p99 = scmp.eq.s32.totalorder %s30, 1
      %p100 = por %p98, %p99
      %p102 = scmp.ne.s32.totalorder %s87, %s101
      %p103 = scmp.eq.s32.totalorder %s30, 0
      %p104 = por %p102, %p103
      %s106 = sadd.s32 %s105, 1
      %p109 = scmp.eq.s32.totalorder %s24, 1
      %p110 = scmp.ne.s32.totalorder %s105, %s107
      %p111 = scmp.eq.s32.totalorder %s24, 0
      %p112 = por %p110, %p111
      %p113 = scmp.ne.s32.totalorder %s105, %s107
      %p114 = scmp.eq.s32.totalorder %s29, 1
      %p115 = por %p113, %p114
      %p116 = scmp.ne.s32.totalorder %s107, %s108
      %p117 = scmp.eq.s32.totalorder %s29, 0
      %p118 = por %p116, %p117
      %p119 = scmp.ne.s32.totalorder %s107, %s108
      %p120 = scmp.eq.s32.totalorder %s30, 1
      %p121 = por %p119, %p120
      %p123 = scmp.ne.s32.totalorder %s108, %s122
      %p124 = scmp.eq.s32.totalorder %s30, 0
      %p125 = por %p123, %p124
      %s126 = ssub.s32 %s24, %s31
      %p127 = scmp.eq.s32.totalorder %s126, 0
      %s129 = sadd.s32 %s128, 1
      %s130 = scalar_select %p127, %s128, %s129
      %p133 = pneg %p127
      %p134 = scmp.eq.s32.totalorder %s24, 1
      %p135 = por %p133, %p134
      %p136 = scmp.ne.s32.totalorder %s128, %s131
      %p137 = scmp.eq.s32.totalorder %s24, 0
      %p138 = por %p136, %p137
      %p139 = scmp.ne.s32.totalorder %s128, %s131
      %p140 = scmp.eq.s32.totalorder %s29, 1
      %p141 = por %p139, %p140
      %p142 = scmp.ne.s32.totalorder %s131, %s132
      %p143 = scmp.eq.s32.totalorder %s29, 0
      %p144 = por %p142, %p143
      %p145 = scmp.ne.s32.totalorder %s131, %s132
      %p146 = scmp.eq.s32.totalorder %s30, 1
      %p147 = por %p145, %p146
      %p149 = scmp.ne.s32.totalorder %s132, %s148
      %p150 = scmp.eq.s32.totalorder %s30, 0
      %p151 = por %p149, %p150
      %s152 = ssub.s32 %s24, %s31
      %p153 = scmp.eq.s32.totalorder %s152, 0
      %s155 = sadd.s32 %s154, 1
      %s156 = scalar_select %p153, %s154, %s155
      %p159 = pneg %p153
      %p160 = scmp.eq.s32.totalorder %s24, 1
      %p161 = por %p159, %p160
      %p162 = scmp.ne.s32.totalorder %s154, %s157
      %p163 = scmp.eq.s32.totalorder %s24, 0
      %p164 = por %p162, %p163
      %p165 = scmp.ne.s32.totalorder %s154, %s157
      %p166 = scmp.eq.s32.totalorder %s29, 1
      %p167 = por %p165, %p166
      %p168 = scmp.ne.s32.totalorder %s157, %s158
      %p169 = scmp.eq.s32.totalorder %s29, 0
      %p170 = por %p168, %p169
      %p171 = scmp.ne.s32.totalorder %s157, %s158
      %p172 = scmp.eq.s32.totalorder %s30, 1
      %p173 = por %p171, %p172
      %p175 = scmp.ne.s32.totalorder %s158, %s174
      %p176 = scmp.eq.s32.totalorder %s30, 0
      %p177 = por %p175, %p176
      %p178 = scmp.le.s32.totalorder 1, %s24
      %p179 = scmp.lt.s32.totalorder %s24, 3
      %p180 = pnand %p178, %p179
      %p181 = pneg %p180
      // Predicated region
      $region9: #{tpu_custom_call.1} parent=5 // pred_check
        _
      $region10: #{tpu_custom_call.1} parent=5 // pred_check_branch
        %183 = sbr.rel (%p180) target = $region12
      $region11: #{tpu_custom_call.1} parent=5 // pred_region
        %s184 = ssub.s32 %s24, 1
        // Predicated region
        $region13: #{tpu_custom_call.1} parent=11 // pred_check
          %p185 = pneg %p97
        $region14: #{tpu_custom_call.1} parent=11 // pred_check_branch
          %187 = sbr.rel (%p185) target = $region16
        $region15: #{tpu_custom_call.1} parent=11 // pred_region
          %189 = vsyncadd [#allocation6], 0
          %s190 = sshll.u32 %s2, 4
          %s191 = int_to_ptr.hbm [resolvable:$true] %s190
          %s192 = sshll.u32 [#allocation7], 4
          %s193 = int_to_ptr.vmem [resolvable:$true] %s192
          %198 = dma.hbm_to_vmem [thread:$0]  %s191, 1024, %s193, [#allocation6], 64, 64, 4
        $region16: #{tpu_custom_call.1} parent=11 // pred_fallthru
          _
        // Predicated region
        $region17: #{tpu_custom_call.1} parent=11 // pred_check
          %p199 = pneg %p118
        $region18: #{tpu_custom_call.1} parent=11 // pred_check_branch
          %201 = sbr.rel (%p199) target = $region20
        $region19: #{tpu_custom_call.1} parent=11 // pred_region
          _
        $region20: #{tpu_custom_call.1} parent=11 // pred_fallthru
          _
      $region12: #{tpu_custom_call.1} parent=5 // pred_fallthru
        _
      %p202 = scmp.lt.s32.totalorder %s24, 2
      // Predicated region
      $region21: #{tpu_custom_call.1} parent=5 // pred_check
        %p203 = pneg %p202
      $region22: #{tpu_custom_call.1} parent=5 // pred_check_branch
        %205 = sbr.rel (%p203) target = $region24
      $region23: #{tpu_custom_call.1} parent=5 // pred_region
        // Predicated region
        $region25: #{tpu_custom_call.1} parent=23 // pred_check
          %p206 = pneg %p44
        $region26: #{tpu_custom_call.1} parent=23 // pred_check_branch
          %208 = sbr.rel (%p206) target = $region28
        $region27: #{tpu_custom_call.1} parent=23 // pred_region
          #allocation12 [shape = 'u32[6]{0}', space=smem, size = 0x18, scoped, tag = 'DMA stride descriptor']
          %s209 = sand.u32 %s34, 1
          %s210 = scalar_lea.sflag [#allocation3], %s209
          %s211 = sand.u32 %s34, 1
          %s212 = smul.addr %s211, 64
          %s213 = scalar_lea.vmem [#allocation2], %s212
          %s214 = smul.u32 2, %s24
          %216 = vsyncadd %s210, 0
          %s217 = smul.addr %s214, 2
          %s218 = smul.addr %s217, 4
          %s219 = scalar_lea.hbm %s0, %s218
          %s221 = sshll.u32 1, 14
          %s222 = sxor.u32 4294967295, %s221
          %s224 = sld [smem:[#allocation0]]
          %s225 = sadd.s32 2, %s224
          %s227 = sshll.u32 7, 26
          %s228 = sxor.u32 4294967295, %s227
          %s229 = sand.u32 0, %s228
          %s230 = sshll.u32 %s225, 26
          %s231 = sor.u32 %s229, %s230
          %s232 = sshll.u32 %s219, 4
          %s233 = int_to_ptr.hbm [resolvable:$true] %s232
          %s234 = sshll.u32 %s213, 4
          %s235 = int_to_ptr.vmem [resolvable:$true] %s234
          %241 = sst [smem:[#allocation12]] 512
          %s242 = scalar_lea.smem [#allocation12], 1
          %243 = sst [smem:[%s242]] 256
          %s244 = scalar_lea.smem [#allocation12], 2
          %245 = sst [smem:[%s244]] 4
          %s246 = scalar_lea.smem [#allocation12], 3
          %247 = sst [smem:[%s246]] 64
          %s248 = scalar_lea.smem [#allocation12], 4
          %249 = sst [smem:[%s248]] 64
          %s250 = scalar_lea.smem [#allocation12], 5
          %251 = sst [smem:[%s250]] 4
          %253 = dma.general %s233, 1024, %s235, %s210, [#allocation11], [#allocation12], %s231, 0
        $region28: #{tpu_custom_call.1} parent=23 // pred_fallthru
          _
        // Predicated region
        $region29: #{tpu_custom_call.1} parent=23 // pred_check
          %p254 = pneg %p70
        $region30: #{tpu_custom_call.1} parent=23 // pred_check_branch
          %256 = sbr.rel (%p254) target = $region32
        $region31: #{tpu_custom_call.1} parent=23 // pred_region
          %s257 = sand.u32 %s24, 1
          %s258 = scalar_lea.sflag [#allocation6], %s257
          %s259 = sand.u32 %s60, 1
          %s260 = smul.addr %s259, 8
          %s261 = scalar_lea.vmem [#allocation5], %s260
          %s262 = smul.u32 2, %s24
          %264 = vsyncadd %s258, 0
          %s265 = smul.addr %s262, 2
          %s266 = smul.addr %s265, 2
          %s267 = scalar_lea.hbm %s1, %s266
          %s268 = sshll.u32 %s267, 4
          %s269 = int_to_ptr.hbm [resolvable:$true] %s268
          %s270 = sshll.u32 %s261, 4
          %s271 = int_to_ptr.vmem [resolvable:$true] %s270
          %276 = dma.hbm_to_vmem [thread:$0]  %s269, 128, %s271, %s258, 32, 32, 2
        $region32: #{tpu_custom_call.1} parent=23 // pred_fallthru
          _
      $region24: #{tpu_custom_call.1} parent=5 // pred_fallthru
        _
      %p277 = scmp.le.s32.totalorder 1, %s24
      %p278 = scmp.lt.s32.totalorder %s24, 3
      %p279 = pnand %p277, %p278
      %p280 = pneg %p279
      // Predicated region
      $region33: #{tpu_custom_call.1} parent=5 // pred_check
        _
      $region34: #{tpu_custom_call.1} parent=5 // pred_check_branch
        %282 = sbr.rel (%p279) target = $region36
      $region35: #{tpu_custom_call.1} parent=5 // pred_region
        %s283 = ssub.s32 %s24, 1
        %s284 = sand.u32 %s37, 1
        %s285 = scalar_lea.sflag [#allocation3], %s284
        %s286 = sand.u32 %s37, 1
        %s287 = smul.addr %s286, 64
        %s288 = scalar_lea.vmem [#allocation2], %s287
        // Predicated region
        $region37: #{tpu_custom_call.1} parent=35 // pred_check
          %p289 = pneg %p50
        $region38: #{tpu_custom_call.1} parent=35 // pred_check_branch
          %291 = sbr.rel (%p289) target = $region40
        $region39: #{tpu_custom_call.1} parent=35 // pred_region
          %293 = dma.done %s285, 1024
        $region40: #{tpu_custom_call.1} parent=35 // pred_fallthru
          _
        %s294 = sand.u32 %s29, 1
        %s295 = scalar_lea.sflag [#allocation6], %s294
        %s296 = sand.u32 %s63, 1
        %s297 = smul.addr %s296, 8
        %s298 = scalar_lea.vmem [#allocation5], %s297
        // Predicated region
        $region41: #{tpu_custom_call.1} parent=35 // pred_check
          %p299 = pneg %p76
        $region42: #{tpu_custom_call.1} parent=35 // pred_check_branch
          %301 = sbr.rel (%p299) target = $region44
        $region43: #{tpu_custom_call.1} parent=35 // pred_region
          %303 = dma.done %s295, 128
        $region44: #{tpu_custom_call.1} parent=35 // pred_fallthru
          _
        // Predicated region
        $region45: #{tpu_custom_call.1} parent=35 // pred_check
          %p304 = pneg %p97
        $region46: #{tpu_custom_call.1} parent=35 // pred_check_branch
          %306 = sbr.rel (%p304) target = $region48
        $region47: #{tpu_custom_call.1} parent=35 // pred_region
          %308 = dma.done [#allocation6], 1024
        $region48: #{tpu_custom_call.1} parent=35 // pred_fallthru
          _
        %s309 = sand.u32 %s37, 1
        %s310 = scalar_lea.sflag [#allocation3], %s309
        %s311 = sand.u32 %s37, 1
        %s312 = smul.addr %s311, 64
        %s313 = scalar_lea.vmem [#allocation2], %s312
        %p314 = pneg %p50
        %p315 = pneg %p47
        %s316 = sand.u32 %s29, 1
        %s317 = scalar_lea.sflag [#allocation6], %s316
        %s318 = sand.u32 %s63, 1
        %s319 = smul.addr %s318, 8
        %s320 = scalar_lea.vmem [#allocation5], %s319
        %p321 = pneg %p76
        %p322 = pneg %p73
        %p323 = pneg %p97
        %p324 = pneg %p94
        %p325 = pneg %p118
        %p326 = pneg %p115
        %p327 = pneg %p144
        %p328 = pneg %p141
        %s329 = sand.u32 %s131, 1
        %s330 = scalar_lea.sflag [#allocation4], %s329
        %s331 = sand.u32 %s131, 1
        %s332 = smul.addr %s331, 16
        %s333 = scalar_lea.vmem [#allocation8], %s332
        %p334 = pneg %p170
        %p335 = pneg %p167
        %s336 = sand.u32 %s157, 1
        %s337 = scalar_lea.sflag [#allocation10], %s336
        %s338 = sand.u32 %s157, 1
        %s339 = smul.addr %s338, 64
        %s340 = scalar_lea.vmem [#allocation9], %s339
        %s341 = smul.u32 2, %s29
        %s342 = smul.u32 2, %s29
        %s343 = smul.u32 2, %s29
        %s344 = smul.u32 2, %s29
        %v348 = vld [vmem:[%s288] sm:$0xf]
        %v349 = vld [vmem:[%s288 + $0x4] sm:$0xf]
        %v350 = vld [vmem:[%s288 + $0x8] sm:$0xf]
        %v351 = vld [vmem:[%s288 + $0xc] sm:$0xf]
        %v352 = vld [vmem:[%s288 + $0x10] sm:$0xf]
        %v353 = vld [vmem:[%s288 + $0x14] sm:$0xf]
        %v354 = vld [vmem:[%s288 + $0x18] sm:$0xf]
        %v355 = vld [vmem:[%s288 + $0x1c] sm:$0xf]
        %v356 = vld [vmem:[%s288 + $0x20] sm:$0xf]
        %v357 = vld [vmem:[%s288 + $0x24] sm:$0xf]
        %v358 = vld [vmem:[%s288 + $0x28] sm:$0xf]
        %v359 = vld [vmem:[%s288 + $0x2c] sm:$0xf]
        %v360 = vld [vmem:[%s288 + $0x30] sm:$0xf]
        %v361 = vld [vmem:[%s288 + $0x34] sm:$0xf]
        %v362 = vld [vmem:[%s288 + $0x38] sm:$0xf]
        %v363 = vld [vmem:[%s288 + $0x3c] sm:$0xf]
        %v364 = vld [vmem:[%s298] sm:$0x3]
        %v365 = vld [vmem:[%s298 + $0x2] sm:$0x3]
        %v366 = vld [vmem:[%s298 + $0x4] sm:$0x3]
        %v367 = vld [vmem:[%s298 + $0x6] sm:$0x3]
        %vm368 = vnez %v364
        %vm369 = vnez %v365
        %vm370 = vnez %v366
        %vm371 = vnez %v367
        %v372 = vld [vmem:[#allocation7] sm:$0xf]
        %v373 = vld [vmem:[#allocation7 + $0x4] sm:$0xf]
        %v374 = vld [vmem:[#allocation7 + $0x8] sm:$0xf]
        %v375 = vld [vmem:[#allocation7 + $0xc] sm:$0xf]
        %v376 = vld [vmem:[#allocation7 + $0x10] sm:$0xf]
        %v377 = vld [vmem:[#allocation7 + $0x14] sm:$0xf]
        %v378 = vld [vmem:[#allocation7 + $0x18] sm:$0xf]
        %v379 = vld [vmem:[#allocation7 + $0x1c] sm:$0xf]
        %v380 = vld [vmem:[#allocation7 + $0x20] sm:$0xf]
        %v381 = vld [vmem:[#allocation7 + $0x24] sm:$0xf]
        %v382 = vld [vmem:[#allocation7 + $0x28] sm:$0xf]
        %v383 = vld [vmem:[#allocation7 + $0x2c] sm:$0xf]
        %v384 = vld [vmem:[#allocation7 + $0x30] sm:$0xf]
        %v385 = vld [vmem:[#allocation7 + $0x34] sm:$0xf]
        %v386 = vld [vmem:[#allocation7 + $0x38] sm:$0xf]
        %v387 = vld [vmem:[#allocation7 + $0x3c] sm:$0xf]
        %v390 = vunpack.c.l.b16 %v348
        %v391 = vunpack.c.l.b16 %v349
        %v392 = vpack.c.b16 %v391, %v390
        %vm393 = vcmask 261120
        %v395 = vsel %vm393, %v392, 0
        %397 = vmatpush.bf16.xpose.msra.mxu0 0
        %398 = vmatpush.bf16.xpose.msra.mxu0 0
        %399 = vmatpush.bf16.xpose.msra.mxu0 0
        %400 = vmatpush.bf16.xpose.msra.mxu0 0
        %401 = vmatpush.bf16.xpose.msra.mxu0 0
        %402 = vmatpush.bf16.xpose.msra.mxu0 0
        %403 = vmatpush.bf16.xpose.msra.mxu0 0
        %404 = vmatpush.bf16.xpose.msra.mxu0 %v395
        %405 = vmatmul.bf16.gmra.mxu0 %v395
        %v406 = vpop.f32.mrf.mxu0
        %v407 = vadd.f32 0.0, %v406
        %v408 = vpop.f32.mrf.mxu0
        %v409 = vadd.f32 0.0, %v408
        %410 = vdwg.mxu0
        %v413 = vunpack.c.l.b16 %v350
        %v414 = vunpack.c.l.b16 %v351
        %v415 = vpack.c.b16 %v414, %v413
        %v417 = vsel %vm393, %v415, 0
        %419 = vmatpush.bf16.xpose.msra.mxu0 0
        %420 = vmatpush.bf16.xpose.msra.mxu0 0
        %421 = vmatpush.bf16.xpose.msra.mxu0 0
        %422 = vmatpush.bf16.xpose.msra.mxu0 0
        %423 = vmatpush.bf16.xpose.msra.mxu0 0
        %424 = vmatpush.bf16.xpose.msra.mxu0 0
        %425 = vmatpush.bf16.xpose.msra.mxu0 0
        %426 = vmatpush.bf16.xpose.msra.mxu0 %v417
        %427 = vmatmul.bf16.gmra.mxu0 %v417
        %v428 = vpop.f32.mrf.mxu0
        %v429 = vadd.f32 0.0, %v428
        %v430 = vpop.f32.mrf.mxu0
        %v431 = vadd.f32 0.0, %v430
        %432 = vdwg.mxu0
        %v435 = vunpack.c.l.b16 %v352
        %v436 = vunpack.c.l.b16 %v353
        %v437 = vpack.c.b16 %v436, %v435
        %v439 = vsel %vm393, %v437, 0
        %441 = vmatpush.bf16.xpose.msra.mxu0 0
        %442 = vmatpush.bf16.xpose.msra.mxu0 0
        %443 = vmatpush.bf16.xpose.msra.mxu0 0
        %444 = vmatpush.bf16.xpose.msra.mxu0 0
        %445 = vmatpush.bf16.xpose.msra.mxu0 0
        %446 = vmatpush.bf16.xpose.msra.mxu0 0
        %447 = vmatpush.bf16.xpose.msra.mxu0 0
        %448 = vmatpush.bf16.xpose.msra.mxu0 %v439
        %449 = vmatmul.bf16.gmra.mxu0 %v439
        %v450 = vpop.f32.mrf.mxu0
        %v451 = vadd.f32 0.0, %v450
        %v452 = vpop.f32.mrf.mxu0
        %v453 = vadd.f32 0.0, %v452
        %454 = vdwg.mxu0
        %v457 = vunpack.c.l.b16 %v354
        %v458 = vunpack.c.l.b16 %v355
        %v459 = vpack.c.b16 %v458, %v457
        %v461 = vsel %vm393, %v459, 0
        %463 = vmatpush.bf16.xpose.msra.mxu0 0
        %464 = vmatpush.bf16.xpose.msra.mxu0 0
        %465 = vmatpush.bf16.xpose.msra.mxu0 0
        %466 = vmatpush.bf16.xpose.msra.mxu0 0
        %467 = vmatpush.bf16.xpose.msra.mxu0 0
        %468 = vmatpush.bf16.xpose.msra.mxu0 0
        %469 = vmatpush.bf16.xpose.msra.mxu0 0
        %470 = vmatpush.bf16.xpose.msra.mxu0 %v461
        %471 = vmatmul.bf16.gmra.mxu0 %v461
        %v472 = vpop.f32.mrf.mxu0
        %v473 = vadd.f32 0.0, %v472
        %v474 = vpop.f32.mrf.mxu0
        %v475 = vadd.f32 0.0, %v474
        %476 = vdwg.mxu0
        %v479 = vunpack.c.l.b16 %v356
        %v480 = vunpack.c.l.b16 %v357
        %v481 = vpack.c.b16 %v480, %v479
        %v483 = vsel %vm393, %v481, 0
        %485 = vmatpush.bf16.xpose.msra.mxu0 0
        %486 = vmatpush.bf16.xpose.msra.mxu0 0
        %487 = vmatpush.bf16.xpose.msra.mxu0 0
        %488 = vmatpush.bf16.xpose.msra.mxu0 0
        %489 = vmatpush.bf16.xpose.msra.mxu0 0
        %490 = vmatpush.bf16.xpose.msra.mxu0 0
        %491 = vmatpush.bf16.xpose.msra.mxu0 0
        %492 = vmatpush.bf16.xpose.msra.mxu0 %v483
        %493 = vmatmul.bf16.gmra.mxu0 %v483
        %v494 = vpop.f32.mrf.mxu0
        %v495 = vadd.f32 0.0, %v494
        %v496 = vpop.f32.mrf.mxu0
        %v497 = vadd.f32 0.0, %v496
        %498 = vdwg.mxu0
        %v501 = vunpack.c.l.b16 %v358
        %v502 = vunpack.c.l.b16 %v359
        %v503 = vpack.c.b16 %v502, %v501
        %v505 = vsel %vm393, %v503, 0
        %507 = vmatpush.bf16.xpose.msra.mxu0 0
        %508 = vmatpush.bf16.xpose.msra.mxu0 0
        %509 = vmatpush.bf16.xpose.msra.mxu0 0
        %510 = vmatpush.bf16.xpose.msra.mxu0 0
        %511 = vmatpush.bf16.xpose.msra.mxu0 0
        %512 = vmatpush.bf16.xpose.msra.mxu0 0
        %513 = vmatpush.bf16.xpose.msra.mxu0 0
        %514 = vmatpush.bf16.xpose.msra.mxu0 %v505
        %515 = vmatmul.bf16.gmra.mxu0 %v505
        %v516 = vpop.f32.mrf.mxu0
        %v517 = vadd.f32 0.0, %v516
        %v518 = vpop.f32.mrf.mxu0
        %v519 = vadd.f32 0.0, %v518
        %520 = vdwg.mxu0
        %v523 = vunpack.c.l.b16 %v360
        %v524 = vunpack.c.l.b16 %v361
        %v525 = vpack.c.b16 %v524, %v523
        %v527 = vsel %vm393, %v525, 0
        %529 = vmatpush.bf16.xpose.msra.mxu0 0
        %530 = vmatpush.bf16.xpose.msra.mxu0 0
        %531 = vmatpush.bf16.xpose.msra.mxu0 0
        %532 = vmatpush.bf16.xpose.msra.mxu0 0
        %533 = vmatpush.bf16.xpose.msra.mxu0 0
        %534 = vmatpush.bf16.xpose.msra.mxu0 0
        %535 = vmatpush.bf16.xpose.msra.mxu0 0
        %536 = vmatpush.bf16.xpose.msra.mxu0 %v527
        %537 = vmatmul.bf16.gmra.mxu0 %v527
        %v538 = vpop.f32.mrf.mxu0
        %v539 = vadd.f32 0.0, %v538
        %v540 = vpop.f32.mrf.mxu0
        %v541 = vadd.f32 0.0, %v540
        %542 = vdwg.mxu0
        %v545 = vunpack.c.l.b16 %v362
        %v546 = vunpack.c.l.b16 %v363
        %v547 = vpack.c.b16 %v546, %v545
        %v549 = vsel %vm393, %v547, 0
        %551 = vmatpush.bf16.xpose.msra.mxu0 0
        %552 = vmatpush.bf16.xpose.msra.mxu0 0
        %553 = vmatpush.bf16.xpose.msra.mxu0 0
        %554 = vmatpush.bf16.xpose.msra.mxu0 0
        %555 = vmatpush.bf16.xpose.msra.mxu0 0
        %556 = vmatpush.bf16.xpose.msra.mxu0 0
        %557 = vmatpush.bf16.xpose.msra.mxu0 0
        %558 = vmatpush.bf16.xpose.msra.mxu0 %v549
        %559 = vmatmul.bf16.gmra.mxu0 %v549
        %v560 = vpop.f32.mrf.mxu0
        %v561 = vadd.f32 0.0, %v560
        %v562 = vpop.f32.mrf.mxu0
        %v563 = vadd.f32 0.0, %v562
        %564 = vdwg.mxu0
        %v565 = vmul.f32 %v407, 0.17677669
        %v566 = vmul.f32 %v409, 0.17677669
        %v567 = vmul.f32 %v429, 0.17677669
        %v568 = vmul.f32 %v431, 0.17677669
        %v569 = vmul.f32 %v451, 0.17677669
        %v570 = vmul.f32 %v453, 0.17677669
        %v571 = vmul.f32 %v473, 0.17677669
        %v572 = vmul.f32 %v475, 0.17677669
        %v573 = vmul.f32 %v495, 0.17677669
        %v574 = vmul.f32 %v497, 0.17677669
        %v575 = vmul.f32 %v517, 0.17677669
        %v576 = vmul.f32 %v519, 0.17677669
        %v577 = vmul.f32 %v539, 0.17677669
        %v578 = vmul.f32 %v541, 0.17677669
        %v579 = vmul.f32 %v561, 0.17677669
        %v580 = vmul.f32 %v563, 0.17677669
        %v581 = vsel %vm368, 16843009, 0
        %v582 = vsel %vm369, 16843009, 0
        %v583 = vsel %vm370, 16843009, 0
        %v584 = vsel %vm371, 16843009, 0
        %v585 = vunpack.c.0.s8 %v581
        %v586 = vunpack.c.0.s8 %v582
        %v587 = vunpack.c.0.s8 %v583
        %v588 = vunpack.c.0.s8 %v584
        %vm589 = vcmp.ne.s32.totalorder %v585, 0
        %vm590 = vcmp.ne.s32.totalorder %v586, 0
        %vm591 = vcmp.ne.s32.totalorder %v587, 0
        %vm592 = vcmp.ne.s32.totalorder %v588, 0
        %v593 = vsel %vm589, 1, 0
        %v594 = vsel %vm590, 1, 0
        %v595 = vsel %vm591, 1, 0
        %v596 = vsel %vm592, 1, 0
        %vm597 = vcmp.eq.s32.totalorder %v593, 1
        %vm598 = vcmp.eq.s32.totalorder %v594, 1
        %vm599 = vcmp.eq.s32.totalorder %v595, 1
        %vm600 = vcmp.eq.s32.totalorder %v596, 1
        %v601 = vsel %vm597, -1e+09, %v565
        %v602 = vsel %vm598, -1e+09, %v566
        %v603 = vsel %vm599, -1e+09, %v567
        %v604 = vsel %vm600, -1e+09, %v568
        %v605 = vsel %vm597, -1e+09, %v569
        %v606 = vsel %vm598, -1e+09, %v570
        %v607 = vsel %vm599, -1e+09, %v571
        %v608 = vsel %vm600, -1e+09, %v572
        %v609 = vsel %vm597, -1e+09, %v573
        %v610 = vsel %vm598, -1e+09, %v574
        %v611 = vsel %vm599, -1e+09, %v575
        %v612 = vsel %vm600, -1e+09, %v576
        %v613 = vsel %vm597, -1e+09, %v577
        %v614 = vsel %vm598, -1e+09, %v578
        %v615 = vsel %vm599, -1e+09, %v579
        %v616 = vsel %vm600, -1e+09, %v580
        %vm617 = vcmask 130048
        %v618 = vsel %vm617, %v601, -inf
        %619 = vmax.xlane.f32.xlu0 %v618
        %v620 = vpop.xlane.xlu0 %619
        %v621 = vsel %vm617, %v602, -inf
        %622 = vmax.xlane.f32.xlu0 %v621
        %v623 = vpop.xlane.xlu0 %622
        %v624 = vsel %vm617, %v603, -inf
        %625 = vmax.xlane.f32.xlu0 %v624
        %v626 = vpop.xlane.xlu0 %625
        %v627 = vsel %vm617, %v604, -inf
        %628 = vmax.xlane.f32.xlu0 %v627
        %v629 = vpop.xlane.xlu0 %628
        %v630 = vsel %vm617, %v605, -inf
        %631 = vmax.xlane.f32.xlu0 %v630
        %v632 = vpop.xlane.xlu0 %631
        %v633 = vsel %vm617, %v606, -inf
        %634 = vmax.xlane.f32.xlu0 %v633
        %v635 = vpop.xlane.xlu0 %634
        %v636 = vsel %vm617, %v607, -inf
        %637 = vmax.xlane.f32.xlu0 %v636
        %v638 = vpop.xlane.xlu0 %637
        %v639 = vsel %vm617, %v608, -inf
        %640 = vmax.xlane.f32.xlu0 %v639
        %v641 = vpop.xlane.xlu0 %640
        %v642 = vsel %vm617, %v609, -inf
        %643 = vmax.xlane.f32.xlu0 %v642
        %v644 = vpop.xlane.xlu0 %643
        %v645 = vsel %vm617, %v610, -inf
        %646 = vmax.xlane.f32.xlu0 %v645
        %v647 = vpop.xlane.xlu0 %646
        %v648 = vsel %vm617, %v611, -inf
        %649 = vmax.xlane.f32.xlu0 %v648
        %v650 = vpop.xlane.xlu0 %649
        %v651 = vsel %vm617, %v612, -inf
        %652 = vmax.xlane.f32.xlu0 %v651
        %v653 = vpop.xlane.xlu0 %652
        %v654 = vsel %vm617, %v613, -inf
        %655 = vmax.xlane.f32.xlu0 %v654
        %v656 = vpop.xlane.xlu0 %655
        %v657 = vsel %vm617, %v614, -inf
        %658 = vmax.xlane.f32.xlu0 %v657
        %v659 = vpop.xlane.xlu0 %658
        %v660 = vsel %vm617, %v615, -inf
        %661 = vmax.xlane.f32.xlu0 %v660
        %v662 = vpop.xlane.xlu0 %661
        %v663 = vsel %vm617, %v616, -inf
        %664 = vmax.xlane.f32.xlu0 %v663
        %v665 = vpop.xlane.xlu0 %664
        %v666 = vsub.f32 %v601, %v620
        %v667 = vsub.f32 %v602, %v623
        %v668 = vsub.f32 %v603, %v626
        %v669 = vsub.f32 %v604, %v629
        %v670 = vsub.f32 %v605, %v632
        %v671 = vsub.f32 %v606, %v635
        %v672 = vsub.f32 %v607, %v638
        %v673 = vsub.f32 %v608, %v641
        %v674 = vsub.f32 %v609, %v644
        %v675 = vsub.f32 %v610, %v647
        %v676 = vsub.f32 %v611, %v650
        %v677 = vsub.f32 %v612, %v653
        %v678 = vsub.f32 %v613, %v656
        %v679 = vsub.f32 %v614, %v659
        %v680 = vsub.f32 %v615, %v662
        %v681 = vsub.f32 %v616, %v665
        %v682 = vmul.f32 %v666, 1.442695
        %v683 = vpow.pop %v682
        %v684 = vmul.f32 %v667, 1.442695
        %v685 = vpow.pop %v684
        %v686 = vmul.f32 %v668, 1.442695
        %v687 = vpow.pop %v686
        %v688 = vmul.f32 %v669, 1.442695
        %v689 = vpow.pop %v688
        %v690 = vmul.f32 %v670, 1.442695
        %v691 = vpow.pop %v690
        %v692 = vmul.f32 %v671, 1.442695
        %v693 = vpow.pop %v692
        %v694 = vmul.f32 %v672, 1.442695
        %v695 = vpow.pop %v694
        %v696 = vmul.f32 %v673, 1.442695
        %v697 = vpow.pop %v696
        %v698 = vmul.f32 %v674, 1.442695
        %v699 = vpow.pop %v698
        %v700 = vmul.f32 %v675, 1.442695
        %v701 = vpow.pop %v700
        %v702 = vmul.f32 %v676, 1.442695
        %v703 = vpow.pop %v702
        %v704 = vmul.f32 %v677, 1.442695
        %v705 = vpow.pop %v704
        %v706 = vmul.f32 %v678, 1.442695
        %v707 = vpow.pop %v706
        %v708 = vmul.f32 %v679, 1.442695
        %v709 = vpow.pop %v708
        %v710 = vmul.f32 %v680, 1.442695
        %v711 = vpow.pop %v710
        %v712 = vmul.f32 %v681, 1.442695
        %v713 = vpow.pop %v712
        %v714 = vsel %vm617, %v683, 0.0
        %715 = vadd.xlane.f32.xlu0 %v714
        %v716 = vpop.xlane.xlu0 %715
        %v717 = vsel %vm617, %v685, 0.0
        %718 = vadd.xlane.f32.xlu0 %v717
        %v719 = vpop.xlane.xlu0 %718
        %v720 = vsel %vm617, %v687, 0.0
        %721 = vadd.xlane.f32.xlu0 %v720
        %v722 = vpop.xlane.xlu0 %721
        %v723 = vsel %vm617, %v689, 0.0
        %724 = vadd.xlane.f32.xlu0 %v723
        %v725 = vpop.xlane.xlu0 %724
        %v726 = vsel %vm617, %v691, 0.0
        %727 = vadd.xlane.f32.xlu0 %v726
        %v728 = vpop.xlane.xlu0 %727
        %v729 = vsel %vm617, %v693, 0.0
        %730 = vadd.xlane.f32.xlu0 %v729
        %v731 = vpop.xlane.xlu0 %730
        %v732 = vsel %vm617, %v695, 0.0
        %733 = vadd.xlane.f32.xlu0 %v732
        %v734 = vpop.xlane.xlu0 %733
        %v735 = vsel %vm617, %v697, 0.0
        %736 = vadd.xlane.f32.xlu0 %v735
        %v737 = vpop.xlane.xlu0 %736
        %v738 = vsel %vm617, %v699, 0.0
        %739 = vadd.xlane.f32.xlu0 %v738
        %v740 = vpop.xlane.xlu0 %739
        %v741 = vsel %vm617, %v701, 0.0
        %742 = vadd.xlane.f32.xlu0 %v741
        %v743 = vpop.xlane.xlu0 %742
        %v744 = vsel %vm617, %v703, 0.0
        %745 = vadd.xlane.f32.xlu0 %v744
        %v746 = vpop.xlane.xlu0 %745
        %v747 = vsel %vm617, %v705, 0.0
        %748 = vadd.xlane.f32.xlu0 %v747
        %v749 = vpop.xlane.xlu0 %748
        %v750 = vsel %vm617, %v707, 0.0
        %751 = vadd.xlane.f32.xlu0 %v750
        %v752 = vpop.xlane.xlu0 %751
        %v753 = vsel %vm617, %v709, 0.0
        %754 = vadd.xlane.f32.xlu0 %v753
        %v755 = vpop.xlane.xlu0 %754
        %v756 = vsel %vm617, %v711, 0.0
        %757 = vadd.xlane.f32.xlu0 %v756
        %v758 = vpop.xlane.xlu0 %757
        %v759 = vsel %vm617, %v713, 0.0
        %760 = vadd.xlane.f32.xlu0 %v759
        %v761 = vpop.xlane.xlu0 %760
        %v762 = vrcp.pop %v716
        %v763 = vrcp.pop %v719
        %v764 = vrcp.pop %v722
        %v765 = vrcp.pop %v725
        %v766 = vrcp.pop %v728
        %v767 = vrcp.pop %v731
        %v768 = vrcp.pop %v734
        %v769 = vrcp.pop %v737
        %v770 = vrcp.pop %v740
        %v771 = vrcp.pop %v743
        %v772 = vrcp.pop %v746
        %v773 = vrcp.pop %v749
        %v774 = vrcp.pop %v752
        %v775 = vrcp.pop %v755
        %v776 = vrcp.pop %v758
        %v777 = vrcp.pop %v761
        %v778 = vmul.f32 %v683, %v762
        %v779 = vmul.f32 %v685, %v763
        %v780 = vmul.f32 %v687, %v764
        %v781 = vmul.f32 %v689, %v765
        %v782 = vmul.f32 %v691, %v766
        %v783 = vmul.f32 %v693, %v767
        %v784 = vmul.f32 %v695, %v768
        %v785 = vmul.f32 %v697, %v769
        %v786 = vmul.f32 %v699, %v770
        %v787 = vmul.f32 %v701, %v771
        %v788 = vmul.f32 %v703, %v772
        %v789 = vmul.f32 %v705, %v773
        %v790 = vmul.f32 %v707, %v774
        %v791 = vmul.f32 %v709, %v775
        %v792 = vmul.f32 %v711, %v776
        %v793 = vmul.f32 %v713, %v777
        %v794 = vpack.c.bf16 %v778, %v778
        %v795 = vpack.c.bf16 %v779, %v779
        %v796 = vpack.c.bf16 %v780, %v780
        %v797 = vpack.c.bf16 %v781, %v781
        %v798 = vpack.c.bf16 %v782, %v782
        %v799 = vpack.c.bf16 %v783, %v783
        %v800 = vpack.c.bf16 %v784, %v784
        %v801 = vpack.c.bf16 %v785, %v785
        %v802 = vpack.c.bf16 %v786, %v786
        %v803 = vpack.c.bf16 %v787, %v787
        %v804 = vpack.c.bf16 %v788, %v788
        %v805 = vpack.c.bf16 %v789, %v789
        %v806 = vpack.c.bf16 %v790, %v790
        %v807 = vpack.c.bf16 %v791, %v791
        %v808 = vpack.c.bf16 %v792, %v792
        %v809 = vpack.c.bf16 %v793, %v793
        %vm810 = vcmask 125952
        %811 = vst.msk [vmem:[%s340] sm:$0xf] %vm810, %v794
        %812 = vst.msk [vmem:[%s340 + $0x4] sm:$0xf] %vm810, %v795
        %813 = vst.msk [vmem:[%s340 + $0x8] sm:$0xf] %vm810, %v796
        %814 = vst.msk [vmem:[%s340 + $0xc] sm:$0xf] %vm810, %v797
        %815 = vst.msk [vmem:[%s340 + $0x10] sm:$0xf] %vm810, %v798
        %816 = vst.msk [vmem:[%s340 + $0x14] sm:$0xf] %vm810, %v799
        %817 = vst.msk [vmem:[%s340 + $0x18] sm:$0xf] %vm810, %v800
        %818 = vst.msk [vmem:[%s340 + $0x1c] sm:$0xf] %vm810, %v801
        %819 = vst.msk [vmem:[%s340 + $0x20] sm:$0xf] %vm810, %v802
        %820 = vst.msk [vmem:[%s340 + $0x24] sm:$0xf] %vm810, %v803
        %821 = vst.msk [vmem:[%s340 + $0x28] sm:$0xf] %vm810, %v804
        %822 = vst.msk [vmem:[%s340 + $0x2c] sm:$0xf] %vm810, %v805
        %823 = vst.msk [vmem:[%s340 + $0x30] sm:$0xf] %vm810, %v806
        %824 = vst.msk [vmem:[%s340 + $0x34] sm:$0xf] %vm810, %v807
        %825 = vst.msk [vmem:[%s340 + $0x38] sm:$0xf] %vm810, %v808
        %826 = vst.msk [vmem:[%s340 + $0x3c] sm:$0xf] %vm810, %v809
        %v829 = vunpack.c.l.b16 %v794
        %v830 = vunpack.c.l.b16 %v795
        %v831 = vpack.c.b16 %v830, %v829
        %v834 = vsel %vm617, %v831, 0
        %836 = vmatpush.bf16.msra.mxu0 0
        %837 = vmatpush.bf16.msra.mxu0 0
        %838 = vmatpush.bf16.msra.mxu0 0
        %839 = vmatpush.bf16.msra.mxu0 0
        %840 = vmatpush.bf16.msra.mxu0 0
        %841 = vmatpush.bf16.msra.mxu0 0
        %842 = vmatpush.bf16.msra.mxu0 0
        %843 = vmatpush.bf16.msra.mxu0 %v392
        %844 = vmatmul.bf16.gmra.mxu0 %v834
        %v845 = vpop.f32.mrf.mxu0
        %v846 = vadd.f32 0.0, %v845
        %v847 = vpop.f32.mrf.mxu0
        %v848 = vadd.f32 0.0, %v847
        %849 = vdwg.mxu0
        %v852 = vunpack.c.l.b16 %v796
        %v853 = vunpack.c.l.b16 %v797
        %v854 = vpack.c.b16 %v853, %v852
        %v857 = vsel %vm617, %v854, 0
        %859 = vmatpush.bf16.msra.mxu0 0
        %860 = vmatpush.bf16.msra.mxu0 0
        %861 = vmatpush.bf16.msra.mxu0 0
        %862 = vmatpush.bf16.msra.mxu0 0
        %863 = vmatpush.bf16.msra.mxu0 0
        %864 = vmatpush.bf16.msra.mxu0 0
        %865 = vmatpush.bf16.msra.mxu0 0
        %866 = vmatpush.bf16.msra.mxu0 %v415
        %867 = vmatmul.bf16.gmra.mxu0 %v857
        %v868 = vpop.f32.mrf.mxu0
        %v869 = vadd.f32 0.0, %v868
        %v870 = vpop.f32.mrf.mxu0
        %v871 = vadd.f32 0.0, %v870
        %872 = vdwg.mxu0
        %v875 = vunpack.c.l.b16 %v798
        %v876 = vunpack.c.l.b16 %v799
        %v877 = vpack.c.b16 %v876, %v875
        %v880 = vsel %vm617, %v877, 0
        %882 = vmatpush.bf16.msra.mxu0 0
        %883 = vmatpush.bf16.msra.mxu0 0
        %884 = vmatpush.bf16.msra.mxu0 0
        %885 = vmatpush.bf16.msra.mxu0 0
        %886 = vmatpush.bf16.msra.mxu0 0
        %887 = vmatpush.bf16.msra.mxu0 0
        %888 = vmatpush.bf16.msra.mxu0 0
        %889 = vmatpush.bf16.msra.mxu0 %v437
        %890 = vmatmul.bf16.gmra.mxu0 %v880
        %v891 = vpop.f32.mrf.mxu0
        %v892 = vadd.f32 0.0, %v891
        %v893 = vpop.f32.mrf.mxu0
        %v894 = vadd.f32 0.0, %v893
        %895 = vdwg.mxu0
        %v898 = vunpack.c.l.b16 %v800
        %v899 = vunpack.c.l.b16 %v801
        %v900 = vpack.c.b16 %v899, %v898
        %v903 = vsel %vm617, %v900, 0
        %905 = vmatpush.bf16.msra.mxu0 0
        %906 = vmatpush.bf16.msra.mxu0 0
        %907 = vmatpush.bf16.msra.mxu0 0
        %908 = vmatpush.bf16.msra.mxu0 0
        %909 = vmatpush.bf16.msra.mxu0 0
        %910 = vmatpush.bf16.msra.mxu0 0
        %911 = vmatpush.bf16.msra.mxu0 0
        %912 = vmatpush.bf16.msra.mxu0 %v459
        %913 = vmatmul.bf16.gmra.mxu0 %v903
        %v914 = vpop.f32.mrf.mxu0
        %v915 = vadd.f32 0.0, %v914
        %v916 = vpop.f32.mrf.mxu0
        %v917 = vadd.f32 0.0, %v916
        %918 = vdwg.mxu0
        %v921 = vunpack.c.l.b16 %v802
        %v922 = vunpack.c.l.b16 %v803
        %v923 = vpack.c.b16 %v922, %v921
        %v926 = vsel %vm617, %v923, 0
        %928 = vmatpush.bf16.msra.mxu0 0
        %929 = vmatpush.bf16.msra.mxu0 0
        %930 = vmatpush.bf16.msra.mxu0 0
        %931 = vmatpush.bf16.msra.mxu0 0
        %932 = vmatpush.bf16.msra.mxu0 0
        %933 = vmatpush.bf16.msra.mxu0 0
        %934 = vmatpush.bf16.msra.mxu0 0
        %935 = vmatpush.bf16.msra.mxu0 %v481
        %936 = vmatmul.bf16.gmra.mxu0 %v926
        %v937 = vpop.f32.mrf.mxu0
        %v938 = vadd.f32 0.0, %v937
        %v939 = vpop.f32.mrf.mxu0
        %v940 = vadd.f32 0.0, %v939
        %941 = vdwg.mxu0
        %v944 = vunpack.c.l.b16 %v804
        %v945 = vunpack.c.l.b16 %v805
        %v946 = vpack.c.b16 %v945, %v944
        %v949 = vsel %vm617, %v946, 0
        %951 = vmatpush.bf16.msra.mxu0 0
        %952 = vmatpush.bf16.msra.mxu0 0
        %953 = vmatpush.bf16.msra.mxu0 0
        %954 = vmatpush.bf16.msra.mxu0 0
        %955 = vmatpush.bf16.msra.mxu0 0
        %956 = vmatpush.bf16.msra.mxu0 0
        %957 = vmatpush.bf16.msra.mxu0 0
        %958 = vmatpush.bf16.msra.mxu0 %v503
        %959 = vmatmul.bf16.gmra.mxu0 %v949
        %v960 = vpop.f32.mrf.mxu0
        %v961 = vadd.f32 0.0, %v960
        %v962 = vpop.f32.mrf.mxu0
        %v963 = vadd.f32 0.0, %v962
        %964 = vdwg.mxu0
        %v967 = vunpack.c.l.b16 %v806
        %v968 = vunpack.c.l.b16 %v807
        %v969 = vpack.c.b16 %v968, %v967
        %v972 = vsel %vm617, %v969, 0
        %974 = vmatpush.bf16.msra.mxu0 0
        %975 = vmatpush.bf16.msra.mxu0 0
        %976 = vmatpush.bf16.msra.mxu0 0
        %977 = vmatpush.bf16.msra.mxu0 0
        %978 = vmatpush.bf16.msra.mxu0 0
        %979 = vmatpush.bf16.msra.mxu0 0
        %980 = vmatpush.bf16.msra.mxu0 0
        %981 = vmatpush.bf16.msra.mxu0 %v525
        %982 = vmatmul.bf16.gmra.mxu0 %v972
        %v983 = vpop.f32.mrf.mxu0
        %v984 = vadd.f32 0.0, %v983
        %v985 = vpop.f32.mrf.mxu0
        %v986 = vadd.f32 0.0, %v985
        %987 = vdwg.mxu0
        %v990 = vunpack.c.l.b16 %v808
        %v991 = vunpack.c.l.b16 %v809
        %v992 = vpack.c.b16 %v991, %v990
        %v995 = vsel %vm617, %v992, 0
        %997 = vmatpush.bf16.msra.mxu0 0
        %998 = vmatpush.bf16.msra.mxu0 0
        %999 = vmatpush.bf16.msra.mxu0 0
        %1000 = vmatpush.bf16.msra.mxu0 0
        %1001 = vmatpush.bf16.msra.mxu0 0
        %1002 = vmatpush.bf16.msra.mxu0 0
        %1003 = vmatpush.bf16.msra.mxu0 0
        %1004 = vmatpush.bf16.msra.mxu0 %v547
        %1005 = vmatmul.bf16.gmra.mxu0 %v995
        %v1006 = vpop.f32.mrf.mxu0
        %v1007 = vadd.f32 0.0, %v1006
        %v1008 = vpop.f32.mrf.mxu0
        %v1009 = vadd.f32 0.0, %v1008
        %1010 = vdwg.mxu0
        %v1011 = vpack.c.bf16 %v848, %v846
        %v1012 = vpack.c.bf16 %v871, %v869
        %v1013 = vpack.c.bf16 %v894, %v892
        %v1014 = vpack.c.bf16 %v917, %v915
        %v1019 = vunpack.c.l.b16 %v376
        %v1020 = vunpack.c.l.b16 %v377
        %v1021 = vunpack.c.l.b16 %v378
        %v1022 = vunpack.c.l.b16 %v379
        %v1023 = vpack.c.b16 %v1020, %v1019
        %v1024 = vpack.c.b16 %v1022, %v1021
        %v1028 = vsel %vm393, %v1013, 0
        %v1031 = vsel %vm393, %v1014, 0
        %1033 = vmatpush.bf16.msra.mxu0 0
        %1034 = vmatpush.bf16.msra.mxu0 0
        %1035 = vmatpush.bf16.msra.mxu0 0
        %1036 = vmatpush.bf16.msra.mxu0 0
        %1037 = vmatpush.bf16.msra.mxu0 0
        %1038 = vmatpush.bf16.msra.mxu0 0
        %1039 = vmatpush.bf16.msra.mxu0 %v1024
        %1040 = vmatpush.bf16.msra.mxu0 %v1023
        %1041 = vmatmul.bf16.gmra.mxu0 %v1028
        %v1042 = vpop.f32.mrf.mxu0
        %v1043 = vadd.f32 0.0, %v1042
        %v1044 = vpop.f32.mrf.mxu0
        %v1045 = vadd.f32 0.0, %v1044
        %1046 = vmatmul.bf16.gmra.mxu0 %v1031
        %v1047 = vpop.f32.mrf.mxu0
        %v1048 = vadd.f32 0.0, %v1047
        %v1049 = vpop.f32.mrf.mxu0
        %v1050 = vadd.f32 0.0, %v1049
        %1051 = vdwg.mxu0
        %v1056 = vunpack.c.l.b16 %v372
        %v1057 = vunpack.c.l.b16 %v373
        %v1058 = vunpack.c.l.b16 %v374
        %v1059 = vunpack.c.l.b16 %v375
        %v1060 = vpack.c.b16 %v1057, %v1056
        %v1061 = vpack.c.b16 %v1059, %v1058
        %v1065 = vsel %vm393, %v1011, 0
        %v1068 = vsel %vm393, %v1012, 0
        %1070 = vmatpush.bf16.msra.mxu0 0
        %1071 = vmatpush.bf16.msra.mxu0 0
        %1072 = vmatpush.bf16.msra.mxu0 0
        %1073 = vmatpush.bf16.msra.mxu0 0
        %1074 = vmatpush.bf16.msra.mxu0 0
        %1075 = vmatpush.bf16.msra.mxu0 0
        %1076 = vmatpush.bf16.msra.mxu0 %v1061
        %1077 = vmatpush.bf16.msra.mxu0 %v1060
        %1078 = vmatmul.bf16.gmra.mxu0 %v1065
        %v1079 = vpop.f32.mrf.mxu0
        %v1080 = vadd.f32 %v1043, %v1079
        %v1081 = vpop.f32.mrf.mxu0
        %v1082 = vadd.f32 %v1045, %v1081
        %1083 = vmatmul.bf16.gmra.mxu0 %v1068
        %v1084 = vpop.f32.mrf.mxu0
        %v1085 = vadd.f32 %v1048, %v1084
        %v1086 = vpop.f32.mrf.mxu0
        %v1087 = vadd.f32 %v1050, %v1086
        %1088 = vdwg.mxu0
        %v1089 = vpack.c.bf16 %v940, %v938
        %v1090 = vpack.c.bf16 %v963, %v961
        %v1095 = vunpack.c.l.b16 %v380
        %v1096 = vunpack.c.l.b16 %v381
        %v1097 = vunpack.c.l.b16 %v382
        %v1098 = vunpack.c.l.b16 %v383
        %v1099 = vpack.c.b16 %v1096, %v1095
        %v1100 = vpack.c.b16 %v1098, %v1097
        %v1104 = vsel %vm393, %v1089, 0
        %v1107 = vsel %vm393, %v1090, 0
        %1109 = vmatpush.bf16.msra.mxu0 0
        %1110 = vmatpush.bf16.msra.mxu0 0
        %1111 = vmatpush.bf16.msra.mxu0 0
        %1112 = vmatpush.bf16.msra.mxu0 0
        %1113 = vmatpush.bf16.msra.mxu0 0
        %1114 = vmatpush.bf16.msra.mxu0 0
        %1115 = vmatpush.bf16.msra.mxu0 %v1100
        %1116 = vmatpush.bf16.msra.mxu0 %v1099
        %1117 = vmatmul.bf16.gmra.mxu0 %v1104
        %v1118 = vpop.f32.mrf.mxu0
        %v1119 = vadd.f32 0.0, %v1118
        %v1120 = vpop.f32.mrf.mxu0
        %v1121 = vadd.f32 0.0, %v1120
        %1122 = vmatmul.bf16.gmra.mxu0 %v1107
        %v1123 = vpop.f32.mrf.mxu0
        %v1124 = vadd.f32 0.0, %v1123
        %v1125 = vpop.f32.mrf.mxu0
        %v1126 = vadd.f32 0.0, %v1125
        %1127 = vdwg.mxu0
        %v1128 = vadd.f32 %v1080, %v1119
        %v1129 = vadd.f32 %v1082, %v1121
        %v1130 = vadd.f32 %v1085, %v1124
        %v1131 = vadd.f32 %v1087, %v1126
        %v1132 = vpack.c.bf16 %v986, %v984
        %v1133 = vpack.c.bf16 %v1009, %v1007
        %v1138 = vunpack.c.l.b16 %v384
        %v1139 = vunpack.c.l.b16 %v385
        %v1140 = vunpack.c.l.b16 %v386
        %v1141 = vunpack.c.l.b16 %v387
        %v1142 = vpack.c.b16 %v1139, %v1138
        %v1143 = vpack.c.b16 %v1141, %v1140
        %v1147 = vsel %vm393, %v1132, 0
        %v1150 = vsel %vm393, %v1133, 0
        %1152 = vmatpush.bf16.msra.mxu0 0
        %1153 = vmatpush.bf16.msra.mxu0 0
        %1154 = vmatpush.bf16.msra.mxu0 0
        %1155 = vmatpush.bf16.msra.mxu0 0
        %1156 = vmatpush.bf16.msra.mxu0 0
        %1157 = vmatpush.bf16.msra.mxu0 0
        %1158 = vmatpush.bf16.msra.mxu0 %v1143
        %1159 = vmatpush.bf16.msra.mxu0 %v1142
        %1160 = vmatmul.bf16.gmra.mxu0 %v1147
        %v1161 = vpop.f32.mrf.mxu0
        %v1162 = vadd.f32 0.0, %v1161
        %v1163 = vpop.f32.mrf.mxu0
        %v1164 = vadd.f32 0.0, %v1163
        %1165 = vmatmul.bf16.gmra.mxu0 %v1150
        %v1166 = vpop.f32.mrf.mxu0
        %v1167 = vadd.f32 0.0, %v1166
        %v1168 = vpop.f32.mrf.mxu0
        %v1169 = vadd.f32 0.0, %v1168
        %1170 = vdwg.mxu0
        %v1171 = vadd.f32 %v1128, %v1162
        %v1172 = vadd.f32 %v1129, %v1164
        %v1173 = vadd.f32 %v1130, %v1167
        %v1174 = vadd.f32 %v1131, %v1169
        %v1175 = vld [vmem:[%s3] sm:$0x1]
        %v1177 = vperm.slane %v1175, 0
        %v1179 = vadd.f32 %v1171, %v1177
        %v1180 = vadd.f32 %v1172, %v1177
        %v1181 = vadd.f32 %v1173, %v1177
        %v1182 = vadd.f32 %v1174, %v1177
        %v1183 = vpack.c.bf16 %v1179, %v1179
        %v1184 = vpack.c.bf16 %v1180, %v1180
        %v1185 = vpack.c.bf16 %v1181, %v1181
        %v1186 = vpack.c.bf16 %v1182, %v1182
        %1187 = vst [vmem:[%s333] sm:$0xf] %v1183
        %1188 = vst [vmem:[%s333 + $0x4] sm:$0xf] %v1184
        %1189 = vst [vmem:[%s333 + $0x8] sm:$0xf] %v1185
        %1190 = vst [vmem:[%s333 + $0xc] sm:$0xf] %v1186
        %s1191 = sand.u32 %s131, 1
        %s1192 = scalar_lea.sflag [#allocation4], %s1191
        %s1193 = sand.u32 %s131, 1
        %s1194 = smul.addr %s1193, 16
        %s1195 = scalar_lea.vmem [#allocation8], %s1194
        %s1196 = sand.u32 %s157, 1
        %s1197 = scalar_lea.sflag [#allocation10], %s1196
        %s1198 = sand.u32 %s157, 1
        %s1199 = smul.addr %s1198, 64
        %s1200 = scalar_lea.vmem [#allocation9], %s1199
        // Predicated region
        $region49: #{tpu_custom_call.1} parent=35 // pred_check
          %p1201 = pneg %p141
        $region50: #{tpu_custom_call.1} parent=35 // pred_check_branch
          %1203 = sbr.rel (%p1201) target = $region52
        $region51: #{tpu_custom_call.1} parent=35 // pred_region
          %s1204 = smul.u32 2, %s29
          %1206 = vsyncadd %s1192, 0
          %s1207 = smul.addr %s1204, 2
          %s1208 = smul.addr %s1207, 4
          %s1209 = scalar_lea.hbm %s4, %s1208
          %s1210 = sshll.u32 %s1195, 4
          %s1211 = int_to_ptr.vmem [resolvable:$true] %s1210
          %s1212 = sshll.u32 %s1209, 4
          %s1213 = int_to_ptr.hbm [resolvable:$true] %s1212
          %1218 = dma.vmem_to_hbm [thread:$0]  %s1211, 256, %s1213, %s1192, 64, 64, 4
        $region52: #{tpu_custom_call.1} parent=35 // pred_fallthru
          _
        // Predicated region
        $region53: #{tpu_custom_call.1} parent=35 // pred_check
          %p1219 = pneg %p167
        $region54: #{tpu_custom_call.1} parent=35 // pred_check_branch
          %1221 = sbr.rel (%p1219) target = $region56
        $region55: #{tpu_custom_call.1} parent=35 // pred_region
          #allocation14 [shape = 'u32[6]{0}', space=smem, size = 0x18, scoped, tag = 'DMA stride descriptor']
          %s1222 = smul.u32 2, %s29
          %1224 = vsyncadd %s1197, 0
          %s1225 = smul.addr %s1222, 2
          %s1226 = smul.addr %s1225, 4
          %s1227 = scalar_lea.hbm %s5, %s1226
          %s1229 = sshll.u32 1, 14
          %s1230 = sxor.u32 4294967295, %s1229
          %s1233 = sshll.u32 7, 18
          %s1234 = sxor.u32 4294967295, %s1233
          %s1235 = sand.u32 0, %s1234
          %s1237 = sor.u32 %s1235, 0
          %s1238 = sshll.u32 %s1200, 4
          %s1239 = int_to_ptr.vmem [resolvable:$true] %s1238
          %s1240 = sshll.u32 %s1227, 4
          %s1241 = int_to_ptr.hbm [resolvable:$true] %s1240
          %1247 = sst [smem:[#allocation14]] 256
          %s1248 = scalar_lea.smem [#allocation14], 1
          %1249 = sst [smem:[%s1248]] 512
          %s1250 = scalar_lea.smem [#allocation14], 2
          %1251 = sst [smem:[%s1250]] 4
          %s1252 = scalar_lea.smem [#allocation14], 3
          %1253 = sst [smem:[%s1252]] 64
          %s1254 = scalar_lea.smem [#allocation14], 4
          %1255 = sst [smem:[%s1254]] 64
          %s1256 = scalar_lea.smem [#allocation14], 5
          %1257 = sst [smem:[%s1256]] 4
          %1259 = dma.general %s1239, 1024, %s1241, %s1197, [#allocation13], [#allocation14], %s1237, 0
        $region56: #{tpu_custom_call.1} parent=35 // pred_fallthru
          _
      $region36: #{tpu_custom_call.1} parent=5 // pred_fallthru
        _
      %p1260 = scmp.le.s32.totalorder 2, %s24
      // Predicated region
      $region57: #{tpu_custom_call.1} parent=5 // pred_check
        %p1261 = pneg %p1260
      $region58: #{tpu_custom_call.1} parent=5 // pred_check_branch
        %1263 = sbr.rel (%p1261) target = $region60
      $region59: #{tpu_custom_call.1} parent=5 // pred_region
        %s1264 = ssub.s32 %s24, 2
        // Predicated region
        $region61: #{tpu_custom_call.1} parent=59 // pred_check
          %p1265 = pneg %p147
        $region62: #{tpu_custom_call.1} parent=59 // pred_check_branch
          %1267 = sbr.rel (%p1265) target = $region64
        $region63: #{tpu_custom_call.1} parent=59 // pred_region
          %s1268 = sand.u32 %s132, 1
          %s1269 = scalar_lea.sflag [#allocation4], %s1268
          %s1270 = sand.u32 %s132, 1
          %s1271 = smul.addr %s1270, 16
          %s1272 = scalar_lea.vmem [#allocation8], %s1271
          %1274 = dma.done %s1269, 256
        $region64: #{tpu_custom_call.1} parent=59 // pred_fallthru
          _
        // Predicated region
        $region65: #{tpu_custom_call.1} parent=59 // pred_check
          %p1275 = pneg %p173
        $region66: #{tpu_custom_call.1} parent=59 // pred_check_branch
          %1277 = sbr.rel (%p1275) target = $region68
        $region67: #{tpu_custom_call.1} parent=59 // pred_region
          %s1278 = sand.u32 %s158, 1
          %s1279 = scalar_lea.sflag [#allocation10], %s1278
          %s1280 = sand.u32 %s158, 1
          %s1281 = smul.addr %s1280, 64
          %s1282 = scalar_lea.vmem [#allocation9], %s1281
          %1284 = dma.done %s1279, 1024
        $region68: #{tpu_custom_call.1} parent=59 // pred_fallthru
          _
      $region60: #{tpu_custom_call.1} parent=5 // pred_fallthru
        _
    $region6: #{tpu_custom_call.1} parent=1 // loop_footer
      %s28 = sadd.s32 1, %s24
    $region7: #{tpu_custom_call.1} parent=1 // loop_footer_branch
      %23 = sbr.rel target = $region3
    $region8: #{tpu_custom_call.1} parent=1 // loop_exit
      _
    %1285 = vsyncpa [#allocation3], 1
    %s1286 = scalar_lea.sflag [#allocation3], 1
    %1287 = vsyncpa %s1286, 1
    %1288 = vsyncpa [#allocation6], 1
    %s1289 = scalar_lea.sflag [#allocation6], 1
    %1290 = vsyncpa %s1289, 1
    %1291 = vsyncpa [#allocation4], 1
    %s1292 = scalar_lea.sflag [#allocation4], 1
    %1293 = vsyncpa %s1292, 1
    %1294 = vsyncpa [#allocation10], 1
    %s1295 = scalar_lea.sflag [#allocation10], 1
    %1296 = vsyncpa %s1295, 1

</llo_original>
